<compile_context>
chip_gen: v5e
topology: v5e:2x2
jax: 0.10.0
libtpu: 0.0.40
codegen_flags: <defaults>
</compile_context>

<pallas_src>
import functools

import jax
import jax.numpy as jnp
from jax.experimental import pallas as pl
from jax.experimental.pallas import tpu as pltpu

# ---------------- model config (small, consistent with the module) -----------
N_LAYERS = 2
NUM_HEADS = 4
HIDDEN_DIM = 32
FFN_DIM = 64
NUM_CLASS = 3
HEAD_DIM = HIDDEN_DIM // NUM_HEADS
N_NODE = 7                      # -> sequence length S = 8
N_EDGE_FEAT = 3                 # attn_edge_type feature dimension
LN_EPS = 1e-5                   # torch.nn.LayerNorm default eps


def _layernorm(v, g, b):
    mu = jnp.mean(v, axis=-1, keepdims=True)
    var = jnp.mean((v - mu) ** 2, axis=-1, keepdims=True)
    return (v - mu) * jax.lax.rsqrt(var + LN_EPS) * g + b


# ---------------- fused Pallas kernel -----------------------------------------
def graphormer_kernel(x_ref, bias_ref,
                      attn_w_ref, attn_b_ref, ln_g_ref, ln_b_ref,
                      w1_ref, b1_ref, w2_ref, b2_ref,
                      fln_ref, proj_w_ref, proj_b_ref,
                      out_ref,
                      *, num_layers, num_heads, head_dim):
    """All EncoderLayers + final_ln + downstream_out_proj in one kernel.

    x: (S, D); bias: (H, S, S).
    attn_w: (L, 4, D, D) [q, k, v, o]; attn_b: (L, 4, D);
    ln_g / ln_b: (L, 2, D) [attn_norm, ffn_norm];
    ffn_w1: (L, D, F); ffn_b1: (L, 1, F); ffn_w2: (L, F, D); ffn_b2: (L, 1, D);
    fln: (2, D) [gamma, beta]; proj_w: (D, C); proj_b: (1, C).
    """
    S, D = x_ref.shape
    scale = head_dim ** (-0.5)

    x = x_ref[...]
    bias = bias_ref[...]                              # (H, S, S), hoisted once

    for l in range(num_layers):                       # static unrolled, L small
        aw = attn_w_ref[l]                            # (4, D, D)
        ab = attn_b_ref[l]                            # (4, D)
        lg = ln_g_ref[l]                              # (2, D)
        lb = ln_b_ref[l]                              # (2, D)

        # --- self-attention branch ---
        y = _layernorm(x, lg[0:1], lb[0:1])
        q = (jnp.dot(y, aw[0], preferred_element_type=jnp.float32) + ab[0:1]) * scale
        k = jnp.dot(y, aw[1], preferred_element_type=jnp.float32) + ab[1:2]
        v = jnp.dot(y, aw[2], preferred_element_type=jnp.float32) + ab[2:3]

        # (S, D) -> (H, S, dk): one relayout instead of per-head slices/.T/concat
        q3 = jnp.transpose(q.reshape(S, num_heads, head_dim), (1, 0, 2))
        k3 = jnp.transpose(k.reshape(S, num_heads, head_dim), (1, 0, 2))
        v3 = jnp.transpose(v.reshape(S, num_heads, head_dim), (1, 0, 2))

        s = jnp.einsum('hqd,hkd->hqk', q3, k3,
                       preferred_element_type=jnp.float32) + bias
        # softmax over last axis (matches torch.softmax(dim=3))
        s = s - jnp.max(s, axis=-1, keepdims=True)
        p = jnp.exp(s)
        p = p * pl.reciprocal(jnp.sum(p, axis=-1, keepdims=True), approx=True)

        ctx3 = jnp.einsum('hqk,hkd->hqd', p, v3,
                          preferred_element_type=jnp.float32)      # (H, S, dk)
        ctx = jnp.transpose(ctx3, (1, 0, 2)).reshape(S, D)

        attn_out = jnp.dot(ctx, aw[3], preferred_element_type=jnp.float32) + ab[3:4]
        x = x + attn_out                              # residual

        # --- FFN branch ---
        y2 = _layernorm(x, lg[1:2], lb[1:2])
        h1 = jnp.dot(y2, w1_ref[l], preferred_element_type=jnp.float32) + b1_ref[l]
        # exact GELU (erf form) — matches torch.nn.GELU() default
        h1 = 0.5 * h1 * (1.0 + jax.lax.erf(h1 * 0.7071067811865476))
        h2 = jnp.dot(h1, w2_ref[l], preferred_element_type=jnp.float32) + b2_ref[l]
        x = x + h2                                    # residual

    # --- final_ln + downstream_out_proj on the graph token (row 0) ---
    fln = fln_ref[...]                                # (2, D)
    yf = _layernorm(x, fln[0:1], fln[1:2])
    cls = yf[0:1, :]                                  # output[:, 0, :]
    out_ref[...] = jnp.dot(cls, proj_w_ref[...],
                           preferred_element_type=jnp.float32) + proj_b_ref[...]


# ---------------- wrapper -------------------------------------------------------
_VMEM = pl.BlockSpec(memory_space=pltpu.MemorySpace.VMEM)


def graphormer_encoder(seq, gab, params):
    args = (seq, gab,
            params['attn_w'], params['attn_b'], params['ln_g'], params['ln_b'],
            params['ffn_w1'], params['ffn_b1'], params['ffn_w2'], params['ffn_b2'],
            params['final_ln'], params['proj_w'], params['proj_b'])
    return pl.pallas_call(
        functools.partial(graphormer_kernel, num_layers=N_LAYERS,
                          num_heads=NUM_HEADS, head_dim=HEAD_DIM),
        out_shape=jax.ShapeDtypeStruct((1, NUM_CLASS), jnp.float32),
        in_specs=[_VMEM] * len(args),
        out_specs=_VMEM,
    )(*args)


# ---------------- parameters (deterministic, in-script) -----------------------
def init_params(key):
    keys = iter(jax.random.split(key, 64))

    def nrm(shape, scale=0.02):
        return scale * jax.random.normal(next(keys), shape, dtype=jnp.float32)

    def emb(num, dim):
        w = nrm((num, dim))
        return w.at[0].set(0.0)             # nn.Embedding(padding_idx=0)

    p = {
        # embedding tables used by the (jit-fused) bias / node-feature assembly
        'spatial_pos_emb': emb(512, NUM_HEADS),
        'edge_emb':        emb(512 * 3 + 1, NUM_HEADS),
        'in_degree_emb':   emb(512, HIDDEN_DIM),
        'out_degree_emb':  emb(512, HIDDEN_DIM),
        'graph_token':     nrm((1, HIDDEN_DIM)),
        'graph_token_vd':  nrm((1, NUM_HEADS)),
        # head
        'final_ln': jnp.concatenate([jnp.ones((1, HIDDEN_DIM), jnp.float32),
                                     jnp.zeros((1, HIDDEN_DIM), jnp.float32)], axis=0),
        'proj_w': nrm((HIDDEN_DIM, NUM_CLASS)),
        'proj_b': nrm((1, NUM_CLASS)),
        # packed per-layer encoder weights (fewer, larger VMEM inputs)
        'attn_w': nrm((N_LAYERS, 4, HIDDEN_DIM, HIDDEN_DIM)),   # q, k, v, o
        'attn_b': nrm((N_LAYERS, 4, HIDDEN_DIM)),
        'ln_g': jnp.ones((N_LAYERS, 2, HIDDEN_DIM), jnp.float32),
        'ln_b': jnp.zeros((N_LAYERS, 2, HIDDEN_DIM), jnp.float32),
        'ffn_w1': nrm((N_LAYERS, HIDDEN_DIM, FFN_DIM)),
        'ffn_b1': nrm((N_LAYERS, 1, FFN_DIM)),
        'ffn_w2': nrm((N_LAYERS, FFN_DIM, HIDDEN_DIM)),
        'ffn_b2': nrm((N_LAYERS, 1, HIDDEN_DIM)),
    }
    return p


# ---------------- full forward (one jit-compiled executable) -------------------
@jax.jit
def graphormer_forward(params, attn_bias, spatial_pos, x, in_degree, attn_edge_type):
    n = x.shape[0]
    H = NUM_HEADS

    # --- graph_attn_bias construction (embedding gathers = glue, fused by jit) ---
    gab = jnp.broadcast_to(attn_bias[None], (H, n + 1, n + 1))          # repeat over heads
    sp_bias = jnp.transpose(params['spatial_pos_emb'][spatial_pos], (2, 0, 1))  # (H,n,n)
    gab = gab.at[:, 1:, 1:].add(sp_bias)
    t = params['graph_token_vd'].reshape(H, 1)
    gab = gab.at[:, 1:, 0].add(t)
    gab = gab.at[:, 0, :].add(t)
    # edge_type != 'multi_hop' branch
    edge_inp = jnp.mean(params['edge_emb'][attn_edge_type], axis=2)     # (n,n,H)
    edge_inp = jnp.transpose(edge_inp, (2, 0, 1))                       # (H,n,n)
    gab = gab.at[:, 1:, 1:].add(edge_inp)
    gab = gab + attn_bias[None]                 # attn_bias.unsqueeze(1) added again

    # --- node features ---
    out_degree = in_degree                      # mirrors torch: both come from in_degree
    node = x + params['in_degree_emb'][in_degree] + params['out_degree_emb'][out_degree]
    seq = jnp.concatenate([params['graph_token'], node], axis=0)        # (n+1, D)

    # --- fused encoder stack + final head (single Pallas kernel) ---
    # input_dropout / attention / ffn dropouts are identity in eval mode.
    return graphormer_encoder(seq, gab, params)


# ---------------- main ----------------------------------------------------------
if __name__ == "__main__":
    key = jax.random.PRNGKey(0)
    kp, k1, k2, k3, k4, k5 = jax.random.split(key, 6)
    params = init_params(kp)

    n = N_NODE
    attn_bias = 0.1 * jax.random.normal(k1, (n + 1, n + 1), dtype=jnp.float32)
    spatial_pos = jax.random.randint(k2, (n, n), 0, 512, dtype=jnp.int32)
    x = jax.random.normal(k3, (n, HIDDEN_DIM), dtype=jnp.float32)
    in_degree = jax.random.randint(k4, (n,), 0, 512, dtype=jnp.int32)
    attn_edge_type = jax.random.randint(k5, (n, n, N_EDGE_FEAT), 0, 512 * 3 + 1,
                                        dtype=jnp.int32)

    out = graphormer_forward(params, attn_bias, spatial_pos, x, in_degree, attn_edge_type)
    out = jax.block_until_ready(out)
    assert out.shape == (1, NUM_CLASS)
    assert bool(jnp.all(jnp.isfinite(out)))
    print("KERNEL_OK")
</pallas_src>

<mosaic_0001>
module attributes {stable_mosaic.version = 11 : i64} {
  func.func @graphormer_kernel(%arg0: memref<8x32xf32, #tpu.memory_space<vmem>>, %arg1: memref<4x8x8xf32, #tpu.memory_space<vmem>>, %arg2: memref<2x4x32x32xf32, #tpu.memory_space<vmem>>, %arg3: memref<2x4x32xf32, #tpu.memory_space<vmem>>, %arg4: memref<2x2x32xf32, #tpu.memory_space<vmem>>, %arg5: memref<2x2x32xf32, #tpu.memory_space<vmem>>, %arg6: memref<2x32x64xf32, #tpu.memory_space<vmem>>, %arg7: memref<2x1x64xf32, #tpu.memory_space<vmem>>, %arg8: memref<2x64x32xf32, #tpu.memory_space<vmem>>, %arg9: memref<2x1x32xf32, #tpu.memory_space<vmem>>, %arg10: memref<2x32xf32, #tpu.memory_space<vmem>>, %arg11: memref<32x3xf32, #tpu.memory_space<vmem>>, %arg12: memref<1x3xf32, #tpu.memory_space<vmem>>, %arg13: memref<1x3xf32, #tpu.memory_space<vmem>>) attributes {dimension_semantics = [], scalar_prefetch = 0 : i64, scratch_operands = 0 : i64, tpu.core_type = #tpu.core_type<tc>} {
    %c0 = arith.constant 0 : index
    %c0_0 = arith.constant 0 : index
    %0 = vector.load %arg0[%c0, %c0_0] : memref<8x32xf32, #tpu.memory_space<vmem>>, vector<8x32xf32>
    %c0_1 = arith.constant 0 : index
    %c0_2 = arith.constant 0 : index
    %c0_3 = arith.constant 0 : index
    %1 = vector.load %arg1[%c0_1, %c0_2, %c0_3] : memref<4x8x8xf32, #tpu.memory_space<vmem>>, vector<4x8x8xf32>
    %c0_4 = arith.constant 0 : index
    %c0_5 = arith.constant 0 : index
    %c0_6 = arith.constant 0 : index
    %c0_7 = arith.constant 0 : index
    %2 = vector.load %arg2[%c0_4, %c0_5, %c0_6, %c0_7] : memref<2x4x32x32xf32, #tpu.memory_space<vmem>>, vector<1x4x32x32xf32>
    %3 = vector.shape_cast %2 : vector<1x4x32x32xf32> to vector<4x32x32xf32>
    %c0_8 = arith.constant 0 : index
    %c0_9 = arith.constant 0 : index
    %c0_10 = arith.constant 0 : index
    %4 = vector.load %arg3[%c0_8, %c0_9, %c0_10] : memref<2x4x32xf32, #tpu.memory_space<vmem>>, vector<1x4x32xf32>
    %5 = vector.shape_cast %4 : vector<1x4x32xf32> to vector<4x32xf32>
    %c0_11 = arith.constant 0 : index
    %c0_12 = arith.constant 0 : index
    %c0_13 = arith.constant 0 : index
    %6 = vector.load %arg4[%c0_11, %c0_12, %c0_13] : memref<2x2x32xf32, #tpu.memory_space<vmem>>, vector<1x2x32xf32>
    %7 = vector.shape_cast %6 : vector<1x2x32xf32> to vector<2x32xf32>
    %c0_14 = arith.constant 0 : index
    %c0_15 = arith.constant 0 : index
    %c0_16 = arith.constant 0 : index
    %8 = vector.load %arg5[%c0_14, %c0_15, %c0_16] : memref<2x2x32xf32, #tpu.memory_space<vmem>>, vector<1x2x32xf32>
    %9 = vector.shape_cast %8 : vector<1x2x32xf32> to vector<2x32xf32>
    %10 = vector.extract_strided_slice %7 {offsets = [0, 0], sizes = [1, 32], strides = [1, 1]} : vector<2x32xf32> to vector<1x32xf32>
    %11 = vector.extract_strided_slice %9 {offsets = [0, 0], sizes = [1, 32], strides = [1, 1]} : vector<2x32xf32> to vector<1x32xf32>
    %cst = arith.constant dense<0.000000e+00> : vector<8xf32>
    %12 = vector.multi_reduction <add>, %0, %cst [1] : vector<8x32xf32> to vector<8xf32>
    %13 = vector.shape_cast %12 : vector<8xf32> to vector<8x1xf32>
    %cst_17 = arith.constant 3.200000e+01 : f32
    %14 = vector.broadcast %cst_17 : f32 to vector<8x1xf32>
    %15 = arith.divf %13, %14 : vector<8x1xf32>
    %16 = vector.broadcast %15 : vector<8x1xf32> to vector<8x32xf32>
    %17 = arith.subf %0, %16 : vector<8x32xf32>
    %18 = arith.mulf %17, %17 : vector<8x32xf32>
    %cst_18 = arith.constant dense<0.000000e+00> : vector<8xf32>
    %19 = vector.multi_reduction <add>, %18, %cst_18 [1] : vector<8x32xf32> to vector<8xf32>
    %20 = vector.shape_cast %19 : vector<8xf32> to vector<8x1xf32>
    %cst_19 = arith.constant 3.200000e+01 : f32
    %21 = vector.broadcast %cst_19 : f32 to vector<8x1xf32>
    %22 = arith.divf %20, %21 : vector<8x1xf32>
    %23 = vector.broadcast %15 : vector<8x1xf32> to vector<8x32xf32>
    %24 = arith.subf %0, %23 : vector<8x32xf32>
    %cst_20 = arith.constant 9.99999974E-6 : f32
    %25 = vector.broadcast %cst_20 : f32 to vector<8x1xf32>
    %26 = arith.addf %22, %25 : vector<8x1xf32>
    %27 = math.rsqrt %26 : vector<8x1xf32>
    %28 = vector.broadcast %27 : vector<8x1xf32> to vector<8x32xf32>
    %29 = arith.mulf %24, %28 : vector<8x32xf32>
    %30 = vector.broadcast %10 : vector<1x32xf32> to vector<8x32xf32>
    %31 = arith.mulf %29, %30 : vector<8x32xf32>
    %32 = vector.broadcast %11 : vector<1x32xf32> to vector<8x32xf32>
    %33 = arith.addf %31, %32 : vector<8x32xf32>
    %34 = vector.extract_strided_slice %3 {offsets = [0, 0, 0], sizes = [1, 32, 32], strides = [1, 1, 1]} : vector<4x32x32xf32> to vector<1x32x32xf32>
    %35 = vector.shape_cast %34 : vector<1x32x32xf32> to vector<32x32xf32>
    %cst_21 = arith.constant dense<0.000000e+00> : vector<8x32xf32>
    %36 = tpu.matmul %33, %35, %cst_21 {dimension_numbers = #tpu.dot_dimension_numbers<[1], [0], [0], [1], [0, 0, 1, 1], [], []>} : vector<8x32xf32>, vector<32x32xf32>, vector<8x32xf32> -> vector<8x32xf32>
    %37 = vector.extract_strided_slice %5 {offsets = [0, 0], sizes = [1, 32], strides = [1, 1]} : vector<4x32xf32> to vector<1x32xf32>
    %38 = vector.broadcast %37 : vector<1x32xf32> to vector<8x32xf32>
    %39 = arith.addf %36, %38 : vector<8x32xf32>
    %cst_22 = arith.constant 0.353553385 : f32
    %40 = vector.broadcast %cst_22 : f32 to vector<8x32xf32>
    %41 = arith.mulf %39, %40 : vector<8x32xf32>
    %42 = vector.extract_strided_slice %3 {offsets = [1, 0, 0], sizes = [1, 32, 32], strides = [1, 1, 1]} : vector<4x32x32xf32> to vector<1x32x32xf32>
    %43 = vector.shape_cast %42 : vector<1x32x32xf32> to vector<32x32xf32>
    %cst_23 = arith.constant dense<0.000000e+00> : vector<8x32xf32>
    %44 = tpu.matmul %33, %43, %cst_23 {dimension_numbers = #tpu.dot_dimension_numbers<[1], [0], [0], [1], [0, 0, 1, 1], [], []>} : vector<8x32xf32>, vector<32x32xf32>, vector<8x32xf32> -> vector<8x32xf32>
    %45 = vector.extract_strided_slice %5 {offsets = [1, 0], sizes = [1, 32], strides = [1, 1]} : vector<4x32xf32> to vector<1x32xf32>
    %46 = vector.broadcast %45 : vector<1x32xf32> to vector<8x32xf32>
    %47 = arith.addf %44, %46 : vector<8x32xf32>
    %48 = vector.extract_strided_slice %3 {offsets = [2, 0, 0], sizes = [1, 32, 32], strides = [1, 1, 1]} : vector<4x32x32xf32> to vector<1x32x32xf32>
    %49 = vector.shape_cast %48 : vector<1x32x32xf32> to vector<32x32xf32>
    %cst_24 = arith.constant dense<0.000000e+00> : vector<8x32xf32>
    %50 = tpu.matmul %33, %49, %cst_24 {dimension_numbers = #tpu.dot_dimension_numbers<[1], [0], [0], [1], [0, 0, 1, 1], [], []>} : vector<8x32xf32>, vector<32x32xf32>, vector<8x32xf32> -> vector<8x32xf32>
    %51 = vector.extract_strided_slice %5 {offsets = [2, 0], sizes = [1, 32], strides = [1, 1]} : vector<4x32xf32> to vector<1x32xf32>
    %52 = vector.broadcast %51 : vector<1x32xf32> to vector<8x32xf32>
    %53 = arith.addf %50, %52 : vector<8x32xf32>
    %54 = vector.shape_cast %41 : vector<8x32xf32> to vector<8x4x8xf32>
    %55 = tpu.transpose %54, [1, 0, 2] : vector<8x4x8xf32> -> vector<4x8x8xf32>
    %56 = vector.shape_cast %47 : vector<8x32xf32> to vector<8x4x8xf32>
    %57 = tpu.transpose %56, [1, 0, 2] : vector<8x4x8xf32> -> vector<4x8x8xf32>
    %58 = vector.shape_cast %53 : vector<8x32xf32> to vector<8x4x8xf32>
    %59 = tpu.transpose %58, [1, 0, 2] : vector<8x4x8xf32> -> vector<4x8x8xf32>
    "tpu.trace_start"() <{level = 10 : i32, message = "hqd,hkd->hqk"}> : () -> ()
    %cst_25 = arith.constant dense<0.000000e+00> : vector<4x8x8xf32>
    %60 = tpu.matmul %55, %57, %cst_25 {dimension_numbers = #tpu.dot_dimension_numbers<[2], [2], [1], [1], [0, 0, 0, 1, 1, 1], [0], [0]>} : vector<4x8x8xf32>, vector<4x8x8xf32>, vector<4x8x8xf32> -> vector<4x8x8xf32>
    "tpu.trace_stop"() : () -> ()
    %61 = arith.addf %60, %1 : vector<4x8x8xf32>
    %cst_26 = arith.constant dense<0xFF800000> : vector<4x8xf32>
    %62 = vector.multi_reduction <maximumf>, %61, %cst_26 [2] : vector<4x8x8xf32> to vector<4x8xf32>
    %63 = vector.shape_cast %62 : vector<4x8xf32> to vector<4x8x1xf32>
    %64 = vector.broadcast %63 : vector<4x8x1xf32> to vector<4x8x8xf32>
    %65 = arith.subf %61, %64 : vector<4x8x8xf32>
    %66 = math.exp %65 : vector<4x8x8xf32>
    %cst_27 = arith.constant dense<0.000000e+00> : vector<4x8xf32>
    %67 = vector.multi_reduction <add>, %66, %cst_27 [2] : vector<4x8x8xf32> to vector<4x8xf32>
    %68 = vector.shape_cast %67 : vector<4x8xf32> to vector<4x8x1xf32>
    %69 = tpu.reciprocal %68 {approx = true} : vector<4x8x1xf32> -> vector<4x8x1xf32>
    %70 = vector.broadcast %69 : vector<4x8x1xf32> to vector<4x8x8xf32>
    %71 = arith.mulf %66, %70 : vector<4x8x8xf32>
    "tpu.trace_start"() <{level = 10 : i32, message = "hqk,hkd->hqd"}> : () -> ()
    %cst_28 = arith.constant dense<0.000000e+00> : vector<4x8x8xf32>
    %72 = tpu.matmul %71, %59, %cst_28 {dimension_numbers = #tpu.dot_dimension_numbers<[2], [1], [1], [2], [0, 0, 0, 1, 1, 2], [0], [0]>} : vector<4x8x8xf32>, vector<4x8x8xf32>, vector<4x8x8xf32> -> vector<4x8x8xf32>
    "tpu.trace_stop"() : () -> ()
    %73 = tpu.transpose %72, [1, 0, 2] : vector<4x8x8xf32> -> vector<8x4x8xf32>
    %74 = vector.shape_cast %73 : vector<8x4x8xf32> to vector<8x32xf32>
    %75 = vector.extract_strided_slice %3 {offsets = [3, 0, 0], sizes = [1, 32, 32], strides = [1, 1, 1]} : vector<4x32x32xf32> to vector<1x32x32xf32>
    %76 = vector.shape_cast %75 : vector<1x32x32xf32> to vector<32x32xf32>
    %cst_29 = arith.constant dense<0.000000e+00> : vector<8x32xf32>
    %77 = tpu.matmul %74, %76, %cst_29 {dimension_numbers = #tpu.dot_dimension_numbers<[1], [0], [0], [1], [0, 0, 1, 1], [], []>} : vector<8x32xf32>, vector<32x32xf32>, vector<8x32xf32> -> vector<8x32xf32>
    %78 = vector.extract_strided_slice %5 {offsets = [3, 0], sizes = [1, 32], strides = [1, 1]} : vector<4x32xf32> to vector<1x32xf32>
    %79 = vector.broadcast %78 : vector<1x32xf32> to vector<8x32xf32>
    %80 = arith.addf %77, %79 : vector<8x32xf32>
    %81 = arith.addf %0, %80 : vector<8x32xf32>
    %82 = vector.extract_strided_slice %7 {offsets = [1, 0], sizes = [1, 32], strides = [1, 1]} : vector<2x32xf32> to vector<1x32xf32>
    %83 = vector.extract_strided_slice %9 {offsets = [1, 0], sizes = [1, 32], strides = [1, 1]} : vector<2x32xf32> to vector<1x32xf32>
    %cst_30 = arith.constant dense<0.000000e+00> : vector<8xf32>
    %84 = vector.multi_reduction <add>, %81, %cst_30 [1] : vector<8x32xf32> to vector<8xf32>
    %85 = vector.shape_cast %84 : vector<8xf32> to vector<8x1xf32>
    %cst_31 = arith.constant 3.200000e+01 : f32
    %86 = vector.broadcast %cst_31 : f32 to vector<8x1xf32>
    %87 = arith.divf %85, %86 : vector<8x1xf32>
    %88 = vector.broadcast %87 : vector<8x1xf32> to vector<8x32xf32>
    %89 = arith.subf %81, %88 : vector<8x32xf32>
    %90 = arith.mulf %89, %89 : vector<8x32xf32>
    %cst_32 = arith.constant dense<0.000000e+00> : vector<8xf32>
    %91 = vector.multi_reduction <add>, %90, %cst_32 [1] : vector<8x32xf32> to vector<8xf32>
    %92 = vector.shape_cast %91 : vector<8xf32> to vector<8x1xf32>
    %cst_33 = arith.constant 3.200000e+01 : f32
    %93 = vector.broadcast %cst_33 : f32 to vector<8x1xf32>
    %94 = arith.divf %92, %93 : vector<8x1xf32>
    %95 = vector.broadcast %87 : vector<8x1xf32> to vector<8x32xf32>
    %96 = arith.subf %81, %95 : vector<8x32xf32>
    %cst_34 = arith.constant 9.99999974E-6 : f32
    %97 = vector.broadcast %cst_34 : f32 to vector<8x1xf32>
    %98 = arith.addf %94, %97 : vector<8x1xf32>
    %99 = math.rsqrt %98 : vector<8x1xf32>
    %100 = vector.broadcast %99 : vector<8x1xf32> to vector<8x32xf32>
    %101 = arith.mulf %96, %100 : vector<8x32xf32>
    %102 = vector.broadcast %82 : vector<1x32xf32> to vector<8x32xf32>
    %103 = arith.mulf %101, %102 : vector<8x32xf32>
    %104 = vector.broadcast %83 : vector<1x32xf32> to vector<8x32xf32>
    %105 = arith.addf %103, %104 : vector<8x32xf32>
    %c0_35 = arith.constant 0 : index
    %c0_36 = arith.constant 0 : index
    %c0_37 = arith.constant 0 : index
    %106 = vector.load %arg6[%c0_35, %c0_36, %c0_37] : memref<2x32x64xf32, #tpu.memory_space<vmem>>, vector<1x32x64xf32>
    %107 = vector.shape_cast %106 : vector<1x32x64xf32> to vector<32x64xf32>
    %cst_38 = arith.constant dense<0.000000e+00> : vector<8x64xf32>
    %108 = tpu.matmul %105, %107, %cst_38 {dimension_numbers = #tpu.dot_dimension_numbers<[1], [0], [0], [1], [0, 0, 1, 1], [], []>} : vector<8x32xf32>, vector<32x64xf32>, vector<8x64xf32> -> vector<8x64xf32>
    %c0_39 = arith.constant 0 : index
    %c0_40 = arith.constant 0 : index
    %c0_41 = arith.constant 0 : index
    %109 = vector.load %arg7[%c0_39, %c0_40, %c0_41] : memref<2x1x64xf32, #tpu.memory_space<vmem>>, vector<1x1x64xf32>
    %110 = vector.shape_cast %109 : vector<1x1x64xf32> to vector<1x64xf32>
    %111 = vector.broadcast %110 : vector<1x64xf32> to vector<8x64xf32>
    %112 = arith.addf %108, %111 : vector<8x64xf32>
    %cst_42 = arith.constant 5.000000e-01 : f32
    %113 = vector.broadcast %cst_42 : f32 to vector<8x64xf32>
    %114 = arith.mulf %113, %112 : vector<8x64xf32>
    %cst_43 = arith.constant 0.707106769 : f32
    %115 = vector.broadcast %cst_43 : f32 to vector<8x64xf32>
    %116 = arith.mulf %112, %115 : vector<8x64xf32>
    %117 = math.erf %116 : vector<8x64xf32>
    %cst_44 = arith.constant 1.000000e+00 : f32
    %118 = vector.broadcast %cst_44 : f32 to vector<8x64xf32>
    %119 = arith.addf %118, %117 : vector<8x64xf32>
    %120 = arith.mulf %114, %119 : vector<8x64xf32>
    %c0_45 = arith.constant 0 : index
    %c0_46 = arith.constant 0 : index
    %c0_47 = arith.constant 0 : index
    %121 = vector.load %arg8[%c0_45, %c0_46, %c0_47] : memref<2x64x32xf32, #tpu.memory_space<vmem>>, vector<1x64x32xf32>
    %122 = vector.shape_cast %121 : vector<1x64x32xf32> to vector<64x32xf32>
    %cst_48 = arith.constant dense<0.000000e+00> : vector<8x32xf32>
    %123 = tpu.matmul %120, %122, %cst_48 {dimension_numbers = #tpu.dot_dimension_numbers<[1], [0], [0], [1], [0, 0, 1, 1], [], []>} : vector<8x64xf32>, vector<64x32xf32>, vector<8x32xf32> -> vector<8x32xf32>
    %c0_49 = arith.constant 0 : index
    %c0_50 = arith.constant 0 : index
    %c0_51 = arith.constant 0 : index
    %124 = vector.load %arg9[%c0_49, %c0_50, %c0_51] : memref<2x1x32xf32, #tpu.memory_space<vmem>>, vector<1x1x32xf32>
    %125 = vector.shape_cast %124 : vector<1x1x32xf32> to vector<1x32xf32>
    %126 = vector.broadcast %125 : vector<1x32xf32> to vector<8x32xf32>
    %127 = arith.addf %123, %126 : vector<8x32xf32>
    %128 = arith.addf %81, %127 : vector<8x32xf32>
    %c1 = arith.constant 1 : index
    %c0_52 = arith.constant 0 : index
    %c0_53 = arith.constant 0 : index
    %c0_54 = arith.constant 0 : index
    %129 = vector.load %arg2[%c1, %c0_52, %c0_53, %c0_54] : memref<2x4x32x32xf32, #tpu.memory_space<vmem>>, vector<1x4x32x32xf32>
    %130 = vector.shape_cast %129 : vector<1x4x32x32xf32> to vector<4x32x32xf32>
    %c1_55 = arith.constant 1 : index
    %c0_56 = arith.constant 0 : index
    %c0_57 = arith.constant 0 : index
    %131 = vector.load %arg3[%c1_55, %c0_56, %c0_57] : memref<2x4x32xf32, #tpu.memory_space<vmem>>, vector<1x4x32xf32>
    %132 = vector.shape_cast %131 : vector<1x4x32xf32> to vector<4x32xf32>
    %c1_58 = arith.constant 1 : index
    %c0_59 = arith.constant 0 : index
    %c0_60 = arith.constant 0 : index
    %133 = vector.load %arg4[%c1_58, %c0_59, %c0_60] : memref<2x2x32xf32, #tpu.memory_space<vmem>>, vector<1x2x32xf32>
    %134 = vector.shape_cast %133 : vector<1x2x32xf32> to vector<2x32xf32>
    %c1_61 = arith.constant 1 : index
    %c0_62 = arith.constant 0 : index
    %c0_63 = arith.constant 0 : index
    %135 = vector.load %arg5[%c1_61, %c0_62, %c0_63] : memref<2x2x32xf32, #tpu.memory_space<vmem>>, vector<1x2x32xf32>
    %136 = vector.shape_cast %135 : vector<1x2x32xf32> to vector<2x32xf32>
    %137 = vector.extract_strided_slice %134 {offsets = [0, 0], sizes = [1, 32], strides = [1, 1]} : vector<2x32xf32> to vector<1x32xf32>
    %138 = vector.extract_strided_slice %136 {offsets = [0, 0], sizes = [1, 32], strides = [1, 1]} : vector<2x32xf32> to vector<1x32xf32>
    %cst_64 = arith.constant dense<0.000000e+00> : vector<8xf32>
    %139 = vector.multi_reduction <add>, %128, %cst_64 [1] : vector<8x32xf32> to vector<8xf32>
    %140 = vector.shape_cast %139 : vector<8xf32> to vector<8x1xf32>
    %cst_65 = arith.constant 3.200000e+01 : f32
    %141 = vector.broadcast %cst_65 : f32 to vector<8x1xf32>
    %142 = arith.divf %140, %141 : vector<8x1xf32>
    %143 = vector.broadcast %142 : vector<8x1xf32> to vector<8x32xf32>
    %144 = arith.subf %128, %143 : vector<8x32xf32>
    %145 = arith.mulf %144, %144 : vector<8x32xf32>
    %cst_66 = arith.constant dense<0.000000e+00> : vector<8xf32>
    %146 = vector.multi_reduction <add>, %145, %cst_66 [1] : vector<8x32xf32> to vector<8xf32>
    %147 = vector.shape_cast %146 : vector<8xf32> to vector<8x1xf32>
    %cst_67 = arith.constant 3.200000e+01 : f32
    %148 = vector.broadcast %cst_67 : f32 to vector<8x1xf32>
    %149 = arith.divf %147, %148 : vector<8x1xf32>
    %150 = vector.broadcast %142 : vector<8x1xf32> to vector<8x32xf32>
    %151 = arith.subf %128, %150 : vector<8x32xf32>
    %cst_68 = arith.constant 9.99999974E-6 : f32
    %152 = vector.broadcast %cst_68 : f32 to vector<8x1xf32>
    %153 = arith.addf %149, %152 : vector<8x1xf32>
    %154 = math.rsqrt %153 : vector<8x1xf32>
    %155 = vector.broadcast %154 : vector<8x1xf32> to vector<8x32xf32>
    %156 = arith.mulf %151, %155 : vector<8x32xf32>
    %157 = vector.broadcast %137 : vector<1x32xf32> to vector<8x32xf32>
    %158 = arith.mulf %156, %157 : vector<8x32xf32>
    %159 = vector.broadcast %138 : vector<1x32xf32> to vector<8x32xf32>
    %160 = arith.addf %158, %159 : vector<8x32xf32>
    %161 = vector.extract_strided_slice %130 {offsets = [0, 0, 0], sizes = [1, 32, 32], strides = [1, 1, 1]} : vector<4x32x32xf32> to vector<1x32x32xf32>
    %162 = vector.shape_cast %161 : vector<1x32x32xf32> to vector<32x32xf32>
    %cst_69 = arith.constant dense<0.000000e+00> : vector<8x32xf32>
    %163 = tpu.matmul %160, %162, %cst_69 {dimension_numbers = #tpu.dot_dimension_numbers<[1], [0], [0], [1], [0, 0, 1, 1], [], []>} : vector<8x32xf32>, vector<32x32xf32>, vector<8x32xf32> -> vector<8x32xf32>
    %164 = vector.extract_strided_slice %132 {offsets = [0, 0], sizes = [1, 32], strides = [1, 1]} : vector<4x32xf32> to vector<1x32xf32>
    %165 = vector.broadcast %164 : vector<1x32xf32> to vector<8x32xf32>
    %166 = arith.addf %163, %165 : vector<8x32xf32>
    %cst_70 = arith.constant 0.353553385 : f32
    %167 = vector.broadcast %cst_70 : f32 to vector<8x32xf32>
    %168 = arith.mulf %166, %167 : vector<8x32xf32>
    %169 = vector.extract_strided_slice %130 {offsets = [1, 0, 0], sizes = [1, 32, 32], strides = [1, 1, 1]} : vector<4x32x32xf32> to vector<1x32x32xf32>
    %170 = vector.shape_cast %169 : vector<1x32x32xf32> to vector<32x32xf32>
    %cst_71 = arith.constant dense<0.000000e+00> : vector<8x32xf32>
    %171 = tpu.matmul %160, %170, %cst_71 {dimension_numbers = #tpu.dot_dimension_numbers<[1], [0], [0], [1], [0, 0, 1, 1], [], []>} : vector<8x32xf32>, vector<32x32xf32>, vector<8x32xf32> -> vector<8x32xf32>
    %172 = vector.extract_strided_slice %132 {offsets = [1, 0], sizes = [1, 32], strides = [1, 1]} : vector<4x32xf32> to vector<1x32xf32>
    %173 = vector.broadcast %172 : vector<1x32xf32> to vector<8x32xf32>
    %174 = arith.addf %171, %173 : vector<8x32xf32>
    %175 = vector.extract_strided_slice %130 {offsets = [2, 0, 0], sizes = [1, 32, 32], strides = [1, 1, 1]} : vector<4x32x32xf32> to vector<1x32x32xf32>
    %176 = vector.shape_cast %175 : vector<1x32x32xf32> to vector<32x32xf32>
    %cst_72 = arith.constant dense<0.000000e+00> : vector<8x32xf32>
    %177 = tpu.matmul %160, %176, %cst_72 {dimension_numbers = #tpu.dot_dimension_numbers<[1], [0], [0], [1], [0, 0, 1, 1], [], []>} : vector<8x32xf32>, vector<32x32xf32>, vector<8x32xf32> -> vector<8x32xf32>
    %178 = vector.extract_strided_slice %132 {offsets = [2, 0], sizes = [1, 32], strides = [1, 1]} : vector<4x32xf32> to vector<1x32xf32>
    %179 = vector.broadcast %178 : vector<1x32xf32> to vector<8x32xf32>
    %180 = arith.addf %177, %179 : vector<8x32xf32>
    %181 = vector.shape_cast %168 : vector<8x32xf32> to vector<8x4x8xf32>
    %182 = tpu.transpose %181, [1, 0, 2] : vector<8x4x8xf32> -> vector<4x8x8xf32>
    %183 = vector.shape_cast %174 : vector<8x32xf32> to vector<8x4x8xf32>
    %184 = tpu.transpose %183, [1, 0, 2] : vector<8x4x8xf32> -> vector<4x8x8xf32>
    %185 = vector.shape_cast %180 : vector<8x32xf32> to vector<8x4x8xf32>
    %186 = tpu.transpose %185, [1, 0, 2] : vector<8x4x8xf32> -> vector<4x8x8xf32>
    "tpu.trace_start"() <{level = 10 : i32, message = "hqd,hkd->hqk"}> : () -> ()
    %cst_73 = arith.constant dense<0.000000e+00> : vector<4x8x8xf32>
    %187 = tpu.matmul %182, %184, %cst_73 {dimension_numbers = #tpu.dot_dimension_numbers<[2], [2], [1], [1], [0, 0, 0, 1, 1, 1], [0], [0]>} : vector<4x8x8xf32>, vector<4x8x8xf32>, vector<4x8x8xf32> -> vector<4x8x8xf32>
    "tpu.trace_stop"() : () -> ()
    %188 = arith.addf %187, %1 : vector<4x8x8xf32>
    %cst_74 = arith.constant dense<0xFF800000> : vector<4x8xf32>
    %189 = vector.multi_reduction <maximumf>, %188, %cst_74 [2] : vector<4x8x8xf32> to vector<4x8xf32>
    %190 = vector.shape_cast %189 : vector<4x8xf32> to vector<4x8x1xf32>
    %191 = vector.broadcast %190 : vector<4x8x1xf32> to vector<4x8x8xf32>
    %192 = arith.subf %188, %191 : vector<4x8x8xf32>
    %193 = math.exp %192 : vector<4x8x8xf32>
    %cst_75 = arith.constant dense<0.000000e+00> : vector<4x8xf32>
    %194 = vector.multi_reduction <add>, %193, %cst_75 [2] : vector<4x8x8xf32> to vector<4x8xf32>
    %195 = vector.shape_cast %194 : vector<4x8xf32> to vector<4x8x1xf32>
    %196 = tpu.reciprocal %195 {approx = true} : vector<4x8x1xf32> -> vector<4x8x1xf32>
    %197 = vector.broadcast %196 : vector<4x8x1xf32> to vector<4x8x8xf32>
    %198 = arith.mulf %193, %197 : vector<4x8x8xf32>
    "tpu.trace_start"() <{level = 10 : i32, message = "hqk,hkd->hqd"}> : () -> ()
    %cst_76 = arith.constant dense<0.000000e+00> : vector<4x8x8xf32>
    %199 = tpu.matmul %198, %186, %cst_76 {dimension_numbers = #tpu.dot_dimension_numbers<[2], [1], [1], [2], [0, 0, 0, 1, 1, 2], [0], [0]>} : vector<4x8x8xf32>, vector<4x8x8xf32>, vector<4x8x8xf32> -> vector<4x8x8xf32>
    "tpu.trace_stop"() : () -> ()
    %200 = tpu.transpose %199, [1, 0, 2] : vector<4x8x8xf32> -> vector<8x4x8xf32>
    %201 = vector.shape_cast %200 : vector<8x4x8xf32> to vector<8x32xf32>
    %202 = vector.extract_strided_slice %130 {offsets = [3, 0, 0], sizes = [1, 32, 32], strides = [1, 1, 1]} : vector<4x32x32xf32> to vector<1x32x32xf32>
    %203 = vector.shape_cast %202 : vector<1x32x32xf32> to vector<32x32xf32>
    %cst_77 = arith.constant dense<0.000000e+00> : vector<8x32xf32>
    %204 = tpu.matmul %201, %203, %cst_77 {dimension_numbers = #tpu.dot_dimension_numbers<[1], [0], [0], [1], [0, 0, 1, 1], [], []>} : vector<8x32xf32>, vector<32x32xf32>, vector<8x32xf32> -> vector<8x32xf32>
    %205 = vector.extract_strided_slice %132 {offsets = [3, 0], sizes = [1, 32], strides = [1, 1]} : vector<4x32xf32> to vector<1x32xf32>
    %206 = vector.broadcast %205 : vector<1x32xf32> to vector<8x32xf32>
    %207 = arith.addf %204, %206 : vector<8x32xf32>
    %208 = arith.addf %128, %207 : vector<8x32xf32>
    %209 = vector.extract_strided_slice %134 {offsets = [1, 0], sizes = [1, 32], strides = [1, 1]} : vector<2x32xf32> to vector<1x32xf32>
    %210 = vector.extract_strided_slice %136 {offsets = [1, 0], sizes = [1, 32], strides = [1, 1]} : vector<2x32xf32> to vector<1x32xf32>
    %cst_78 = arith.constant dense<0.000000e+00> : vector<8xf32>
    %211 = vector.multi_reduction <add>, %208, %cst_78 [1] : vector<8x32xf32> to vector<8xf32>
    %212 = vector.shape_cast %211 : vector<8xf32> to vector<8x1xf32>
    %cst_79 = arith.constant 3.200000e+01 : f32
    %213 = vector.broadcast %cst_79 : f32 to vector<8x1xf32>
    %214 = arith.divf %212, %213 : vector<8x1xf32>
    %215 = vector.broadcast %214 : vector<8x1xf32> to vector<8x32xf32>
    %216 = arith.subf %208, %215 : vector<8x32xf32>
    %217 = arith.mulf %216, %216 : vector<8x32xf32>
    %cst_80 = arith.constant dense<0.000000e+00> : vector<8xf32>
    %218 = vector.multi_reduction <add>, %217, %cst_80 [1] : vector<8x32xf32> to vector<8xf32>
    %219 = vector.shape_cast %218 : vector<8xf32> to vector<8x1xf32>
    %cst_81 = arith.constant 3.200000e+01 : f32
    %220 = vector.broadcast %cst_81 : f32 to vector<8x1xf32>
    %221 = arith.divf %219, %220 : vector<8x1xf32>
    %222 = vector.broadcast %214 : vector<8x1xf32> to vector<8x32xf32>
    %223 = arith.subf %208, %222 : vector<8x32xf32>
    %cst_82 = arith.constant 9.99999974E-6 : f32
    %224 = vector.broadcast %cst_82 : f32 to vector<8x1xf32>
    %225 = arith.addf %221, %224 : vector<8x1xf32>
    %226 = math.rsqrt %225 : vector<8x1xf32>
    %227 = vector.broadcast %226 : vector<8x1xf32> to vector<8x32xf32>
    %228 = arith.mulf %223, %227 : vector<8x32xf32>
    %229 = vector.broadcast %209 : vector<1x32xf32> to vector<8x32xf32>
    %230 = arith.mulf %228, %229 : vector<8x32xf32>
    %231 = vector.broadcast %210 : vector<1x32xf32> to vector<8x32xf32>
    %232 = arith.addf %230, %231 : vector<8x32xf32>
    %c1_83 = arith.constant 1 : index
    %c0_84 = arith.constant 0 : index
    %c0_85 = arith.constant 0 : index
    %233 = vector.load %arg6[%c1_83, %c0_84, %c0_85] : memref<2x32x64xf32, #tpu.memory_space<vmem>>, vector<1x32x64xf32>
    %234 = vector.shape_cast %233 : vector<1x32x64xf32> to vector<32x64xf32>
    %cst_86 = arith.constant dense<0.000000e+00> : vector<8x64xf32>
    %235 = tpu.matmul %232, %234, %cst_86 {dimension_numbers = #tpu.dot_dimension_numbers<[1], [0], [0], [1], [0, 0, 1, 1], [], []>} : vector<8x32xf32>, vector<32x64xf32>, vector<8x64xf32> -> vector<8x64xf32>
    %c1_87 = arith.constant 1 : index
    %c0_88 = arith.constant 0 : index
    %c0_89 = arith.constant 0 : index
    %236 = vector.load %arg7[%c1_87, %c0_88, %c0_89] : memref<2x1x64xf32, #tpu.memory_space<vmem>>, vector<1x1x64xf32>
    %237 = vector.shape_cast %236 : vector<1x1x64xf32> to vector<1x64xf32>
    %238 = vector.broadcast %237 : vector<1x64xf32> to vector<8x64xf32>
    %239 = arith.addf %235, %238 : vector<8x64xf32>
    %cst_90 = arith.constant 5.000000e-01 : f32
    %240 = vector.broadcast %cst_90 : f32 to vector<8x64xf32>
    %241 = arith.mulf %240, %239 : vector<8x64xf32>
    %cst_91 = arith.constant 0.707106769 : f32
    %242 = vector.broadcast %cst_91 : f32 to vector<8x64xf32>
    %243 = arith.mulf %239, %242 : vector<8x64xf32>
    %244 = math.erf %243 : vector<8x64xf32>
    %cst_92 = arith.constant 1.000000e+00 : f32
    %245 = vector.broadcast %cst_92 : f32 to vector<8x64xf32>
    %246 = arith.addf %245, %244 : vector<8x64xf32>
    %247 = arith.mulf %241, %246 : vector<8x64xf32>
    %c1_93 = arith.constant 1 : index
    %c0_94 = arith.constant 0 : index
    %c0_95 = arith.constant 0 : index
    %248 = vector.load %arg8[%c1_93, %c0_94, %c0_95] : memref<2x64x32xf32, #tpu.memory_space<vmem>>, vector<1x64x32xf32>
    %249 = vector.shape_cast %248 : vector<1x64x32xf32> to vector<64x32xf32>
    %cst_96 = arith.constant dense<0.000000e+00> : vector<8x32xf32>
    %250 = tpu.matmul %247, %249, %cst_96 {dimension_numbers = #tpu.dot_dimension_numbers<[1], [0], [0], [1], [0, 0, 1, 1], [], []>} : vector<8x64xf32>, vector<64x32xf32>, vector<8x32xf32> -> vector<8x32xf32>
    %c1_97 = arith.constant 1 : index
    %c0_98 = arith.constant 0 : index
    %c0_99 = arith.constant 0 : index
    %251 = vector.load %arg9[%c1_97, %c0_98, %c0_99] : memref<2x1x32xf32, #tpu.memory_space<vmem>>, vector<1x1x32xf32>
    %252 = vector.shape_cast %251 : vector<1x1x32xf32> to vector<1x32xf32>
    %253 = vector.broadcast %252 : vector<1x32xf32> to vector<8x32xf32>
    %254 = arith.addf %250, %253 : vector<8x32xf32>
    %255 = arith.addf %208, %254 : vector<8x32xf32>
    %c0_100 = arith.constant 0 : index
    %c0_101 = arith.constant 0 : index
    %256 = vector.load %arg10[%c0_100, %c0_101] : memref<2x32xf32, #tpu.memory_space<vmem>>, vector<2x32xf32>
    %257 = vector.extract_strided_slice %256 {offsets = [0, 0], sizes = [1, 32], strides = [1, 1]} : vector<2x32xf32> to vector<1x32xf32>
    %258 = vector.extract_strided_slice %256 {offsets = [1, 0], sizes = [1, 32], strides = [1, 1]} : vector<2x32xf32> to vector<1x32xf32>
    %cst_102 = arith.constant dense<0.000000e+00> : vector<8xf32>
    %259 = vector.multi_reduction <add>, %255, %cst_102 [1] : vector<8x32xf32> to vector<8xf32>
    %260 = vector.shape_cast %259 : vector<8xf32> to vector<8x1xf32>
    %cst_103 = arith.constant 3.200000e+01 : f32
    %261 = vector.broadcast %cst_103 : f32 to vector<8x1xf32>
    %262 = arith.divf %260, %261 : vector<8x1xf32>
    %263 = vector.broadcast %262 : vector<8x1xf32> to vector<8x32xf32>
    %264 = arith.subf %255, %263 : vector<8x32xf32>
    %265 = arith.mulf %264, %264 : vector<8x32xf32>
    %cst_104 = arith.constant dense<0.000000e+00> : vector<8xf32>
    %266 = vector.multi_reduction <add>, %265, %cst_104 [1] : vector<8x32xf32> to vector<8xf32>
    %267 = vector.shape_cast %266 : vector<8xf32> to vector<8x1xf32>
    %cst_105 = arith.constant 3.200000e+01 : f32
    %268 = vector.broadcast %cst_105 : f32 to vector<8x1xf32>
    %269 = arith.divf %267, %268 : vector<8x1xf32>
    %270 = vector.broadcast %262 : vector<8x1xf32> to vector<8x32xf32>
    %271 = arith.subf %255, %270 : vector<8x32xf32>
    %cst_106 = arith.constant 9.99999974E-6 : f32
    %272 = vector.broadcast %cst_106 : f32 to vector<8x1xf32>
    %273 = arith.addf %269, %272 : vector<8x1xf32>
    %274 = math.rsqrt %273 : vector<8x1xf32>
    %275 = vector.broadcast %274 : vector<8x1xf32> to vector<8x32xf32>
    %276 = arith.mulf %271, %275 : vector<8x32xf32>
    %277 = vector.broadcast %257 : vector<1x32xf32> to vector<8x32xf32>
    %278 = arith.mulf %276, %277 : vector<8x32xf32>
    %279 = vector.broadcast %258 : vector<1x32xf32> to vector<8x32xf32>
    %280 = arith.addf %278, %279 : vector<8x32xf32>
    %281 = vector.extract_strided_slice %280 {offsets = [0, 0], sizes = [1, 32], strides = [1, 1]} : vector<8x32xf32> to vector<1x32xf32>
    %c0_107 = arith.constant 0 : index
    %c0_108 = arith.constant 0 : index
    %282 = vector.load %arg11[%c0_107, %c0_108] : memref<32x3xf32, #tpu.memory_space<vmem>>, vector<32x3xf32>
    %cst_109 = arith.constant dense<0.000000e+00> : vector<1x3xf32>
    %283 = tpu.matmul %281, %282, %cst_109 {dimension_numbers = #tpu.dot_dimension_numbers<[1], [0], [0], [1], [0, 0, 1, 1], [], []>} : vector<1x32xf32>, vector<32x3xf32>, vector<1x3xf32> -> vector<1x3xf32>
    %c0_110 = arith.constant 0 : index
    %c0_111 = arith.constant 0 : index
    %284 = vector.load %arg12[%c0_110, %c0_111] : memref<1x3xf32, #tpu.memory_space<vmem>>, vector<1x3xf32>
    %285 = arith.addf %283, %284 : vector<1x3xf32>
    %c0_112 = arith.constant 0 : index
    %c0_113 = arith.constant 0 : index
    %286 = vector.load %arg13[%c0_112, %c0_113] : memref<1x3xf32, #tpu.memory_space<vmem>>, vector<1x3xf32>
    tpu.vector_store %arg13[%c0_112, %c0_113], %285 {strides = array<i32>} : memref<1x3xf32, #tpu.memory_space<vmem>>, vector<1x3xf32>,
    return
  }
}

</mosaic_0001>

<llo_original>
// kernel: graphormer_forward.1
$region0: #{graphormer_forward.1}
  #allocation0 [shape = 'u32[]', space=smem, size = 0x4, offset = 0x4, fixed_abs, tag = 'smem constant byte address 0x4 - core index']
  #allocation1 [shape = 'u32[72,128]{1,0:T(1,128)}', space=vmem, size = 0x9000, scoped, tag = 'internal scratch']
  %s0 = inlined_call_operand.vmem [shape: f32[8,32], index: 0, kind: input, shape index: {}]
  %s1 = inlined_call_operand.vmem [shape: f32[4,8,8], index: 1, kind: input, shape index: {}]
  %s2 = inlined_call_operand.vmem [shape: f32[2,4,32,32], index: 2, kind: input, shape index: {}]
  %s3 = inlined_call_operand.vmem [shape: f32[2,4,32], index: 3, kind: input, shape index: {}]
  %s4 = inlined_call_operand.vmem [shape: f32[2,2,32], index: 4, kind: input, shape index: {}]
  %s5 = inlined_call_operand.vmem [shape: f32[2,2,32], index: 5, kind: input, shape index: {}]
  %s6 = inlined_call_operand.vmem [shape: f32[2,32,64], index: 6, kind: input, shape index: {}]
  %s7 = inlined_call_operand.vmem [shape: f32[2,1,64], index: 7, kind: input, shape index: {}]
  %s8 = inlined_call_operand.vmem [shape: f32[2,64,32], index: 8, kind: input, shape index: {}]
  %s9 = inlined_call_operand.vmem [shape: f32[2,1,32], index: 9, kind: input, shape index: {}]
  %s10 = inlined_call_operand.vmem [shape: f32[2,32], index: 10, kind: input, shape index: {}]
  %s11 = inlined_call_operand.vmem [shape: f32[32,3], index: 11, kind: input, shape index: {}]
  %s12 = inlined_call_operand.vmem [shape: f32[1,3], index: 12, kind: input, shape index: {}]
  %s13 = inlined_call_operand.hbm [shape: f32[1,3], index: 13, kind: output, shape index: {}]
  %s14 = sld [smem:[#allocation0]]
  $region62: #{graphormer_forward.1} parent=0
    _
  %s16 = ssub.s32 1, %s14
  %s17 = scalar_select 0, %s16, %s14
  $region1: #{graphormer_forward.1} parent=0
    #allocation2 [shape = 'u8[512]{0}', space=vmem, size = 0x400, scoped, tag = 'output window, operand 0, single buffered']
    #allocation3 [shape = 's32[1]{0}', space=sflag, size = 0x4, scoped, tag = 'scoped memory for graphormer_forward.1']
    %18 = vsyncpa [#allocation3], 0
    // Predicated region
    $region2: #{graphormer_forward.1} parent=1 // pred_check
      _
    $region3: #{graphormer_forward.1} parent=1 // pred_check_branch
      %20 = sbr.rel (0) target = $region5
    $region4: #{graphormer_forward.1} parent=1 // pred_region
      _
    $region5: #{graphormer_forward.1} parent=1 // pred_fallthru
      _
    // Predicated region
    $region6: #{graphormer_forward.1} parent=1 // pred_check
      _
    $region7: #{graphormer_forward.1} parent=1 // pred_check_branch
      %22 = sbr.rel (0) target = $region9
    $region8: #{graphormer_forward.1} parent=1 // pred_region
      _
    $region9: #{graphormer_forward.1} parent=1 // pred_fallthru
      _
    // Predicated region
    $region10: #{graphormer_forward.1} parent=1 // pred_check
      _
    $region11: #{graphormer_forward.1} parent=1 // pred_check_branch
      %24 = sbr.rel (0) target = $region13
    $region12: #{graphormer_forward.1} parent=1 // pred_region
      _
    $region13: #{graphormer_forward.1} parent=1 // pred_fallthru
      _
    // Predicated region
    $region14: #{graphormer_forward.1} parent=1 // pred_check
      _
    $region15: #{graphormer_forward.1} parent=1 // pred_check_branch
      %26 = sbr.rel (0) target = $region17
    $region16: #{graphormer_forward.1} parent=1 // pred_region
      _
    $region17: #{graphormer_forward.1} parent=1 // pred_fallthru
      _
    // Predicated region
    $region18: #{graphormer_forward.1} parent=1 // pred_check
      _
    $region19: #{graphormer_forward.1} parent=1 // pred_check_branch
      %28 = sbr.rel (0) target = $region21
    $region20: #{graphormer_forward.1} parent=1 // pred_region
      _
    $region21: #{graphormer_forward.1} parent=1 // pred_fallthru
      _
    // Predicated region
    $region22: #{graphormer_forward.1} parent=1 // pred_check
      _
    $region23: #{graphormer_forward.1} parent=1 // pred_check_branch
      %30 = sbr.rel (0) target = $region25
    $region24: #{graphormer_forward.1} parent=1 // pred_region
      _
    $region25: #{graphormer_forward.1} parent=1 // pred_fallthru
      _
    // Predicated region
    $region26: #{graphormer_forward.1} parent=1 // pred_check
      _
    $region27: #{graphormer_forward.1} parent=1 // pred_check_branch
      %32 = sbr.rel (0) target = $region29
    $region28: #{graphormer_forward.1} parent=1 // pred_region
      _
    $region29: #{graphormer_forward.1} parent=1 // pred_fallthru
      _
    // Predicated region
    $region30: #{graphormer_forward.1} parent=1 // pred_check
      _
    $region31: #{graphormer_forward.1} parent=1 // pred_check_branch
      %34 = sbr.rel (0) target = $region33
    $region32: #{graphormer_forward.1} parent=1 // pred_region
      _
    $region33: #{graphormer_forward.1} parent=1 // pred_fallthru
      _
    // Predicated region
    $region34: #{graphormer_forward.1} parent=1 // pred_check
      _
    $region35: #{graphormer_forward.1} parent=1 // pred_check_branch
      %36 = sbr.rel (0) target = $region37
    $region36: #{graphormer_forward.1} parent=1 // pred_region
      _
    $region37: #{graphormer_forward.1} parent=1 // pred_fallthru
      _
    // Predicated region
    $region38: #{graphormer_forward.1} parent=1 // pred_check
      _
    $region39: #{graphormer_forward.1} parent=1 // pred_check_branch
      %38 = sbr.rel (0) target = $region41
    $region40: #{graphormer_forward.1} parent=1 // pred_region
      _
    $region41: #{graphormer_forward.1} parent=1 // pred_fallthru
      _
    // Predicated region
    $region42: #{graphormer_forward.1} parent=1 // pred_check
      _
    $region43: #{graphormer_forward.1} parent=1 // pred_check_branch
      %40 = sbr.rel (0) target = $region45
    $region44: #{graphormer_forward.1} parent=1 // pred_region
      _
    $region45: #{graphormer_forward.1} parent=1 // pred_fallthru
      _
    // Predicated region
    $region46: #{graphormer_forward.1} parent=1 // pred_check
      _
    $region47: #{graphormer_forward.1} parent=1 // pred_check_branch
      %42 = sbr.rel (0) target = $region49
    $region48: #{graphormer_forward.1} parent=1 // pred_region
      _
    $region49: #{graphormer_forward.1} parent=1 // pred_fallthru
      _
    // Predicated region
    $region50: #{graphormer_forward.1} parent=1 // pred_check
      _
    $region51: #{graphormer_forward.1} parent=1 // pred_check_branch
      %44 = sbr.rel (0) target = $region53
    $region52: #{graphormer_forward.1} parent=1 // pred_region
      _
    $region53: #{graphormer_forward.1} parent=1 // pred_fallthru
      _
    %v45 = vld [vmem:[%s0] sm:$0xff]
    %v46 = vld [vmem:[%s1] sm:$0xff]
    %v47 = vld [vmem:[%s1 + $0x8] sm:$0xff]
    %v48 = vld [vmem:[%s1 + $0x10] sm:$0xff]
    %v49 = vld [vmem:[%s1 + $0x18] sm:$0xff]
    %v50 = vld [vmem:[%s2] sm:$0xff]
    %v51 = vld [vmem:[%s2 + $0x8] sm:$0xff]
    %v52 = vld [vmem:[%s2 + $0x10] sm:$0xff]
    %v53 = vld [vmem:[%s2 + $0x18] sm:$0xff]
    %v54 = vld [vmem:[%s2 + $0x20] sm:$0xff]
    %v55 = vld [vmem:[%s2 + $0x28] sm:$0xff]
    %v56 = vld [vmem:[%s2 + $0x30] sm:$0xff]
    %v57 = vld [vmem:[%s2 + $0x38] sm:$0xff]
    %v58 = vld [vmem:[%s2 + $0x40] sm:$0xff]
    %v59 = vld [vmem:[%s2 + $0x48] sm:$0xff]
    %v60 = vld [vmem:[%s2 + $0x50] sm:$0xff]
    %v61 = vld [vmem:[%s2 + $0x58] sm:$0xff]
    %v62 = vld [vmem:[%s2 + $0x60] sm:$0xff]
    %v63 = vld [vmem:[%s2 + $0x68] sm:$0xff]
    %v64 = vld [vmem:[%s2 + $0x70] sm:$0xff]
    %v65 = vld [vmem:[%s2 + $0x78] sm:$0xff]
    %v66 = vld [vmem:[%s3] sm:$0xf]
    %v67 = vld [vmem:[%s4] sm:$0x3]
    %v68 = vld [vmem:[%s5] sm:$0x3]
    %vm69 = vcmask 261120
    %v70 = vsel %vm69, %v45, 0.0
    %71 = vadd.xlane.f32.xlu0 %v70
    %v72 = vpop.xlane.xlu0 %71
    %v73 = vrcp.pop 32.0
    %v74 = vmul.f32 32.0, %v73
    %v75 = vsub.f32 1.0, %v74
    %v76 = vmul.f32 %v73, %v75
    %v77 = vadd.f32 %v73, %v76
    %vm78 = vweird.f32 %v73
    %v79 = vsel %vm78, %v73, %v77
    %v80 = vmul.f32 %v72, %v79
    %v81 = vsub.f32 %v45, %v80
    %v82 = vmul.f32 %v81, %v81
    %v83 = vsel %vm69, %v82, 0.0
    %84 = vadd.xlane.f32.xlu0 %v83
    %v85 = vpop.xlane.xlu0 %84
    %v86 = vmul.f32 %v85, %v79
    %v87 = vadd.f32 %v86, 1e-05
    %v88 = vrsqrt.pop %v87
    %v89 = vmul.f32 %v88, %v87
    %v90 = vmul.f32 %v89, %v88
    %v91 = vmul.f32 0.5, %v90
    %v92 = vsub.f32 1.5, %v91
    %v93 = vmul.f32 %v88, %v92
    %vm94 = vweird.f32 %v87
    %vm95 = vweird.f32 %v88
    %vm96 = vmor %vm94, %vm95
    %v97 = vsel %vm96, %v88, %v93
    %v98 = vmul.f32 %v81, %v97
    %v99 = vperm.slane %v67, 0
    %v100 = vmul.f32 %v98, %v99
    %v101 = vperm.slane %v68, 0
    %v102 = vadd.f32 %v100, %v101
    %v103 = vperm.slane %v66, 0
    %v105 = vsel %vm69, %v102, 0
    %107 = vmatpush.msra.mxu0 0.0
    %108 = vmatpush.msra.mxu0 0.0
    %109 = vmatpush.msra.mxu0 0.0
    %110 = vmatpush.msra.mxu0 0.0
    %111 = vmatpush.msra.mxu0 0.0
    %112 = vmatpush.msra.mxu0 0.0
    %113 = vmatpush.msra.mxu0 0.0
    %114 = vmatpush.msra.mxu0 0.0
    %115 = vmatpush.msra.mxu0 0.0
    %116 = vmatpush.msra.mxu0 0.0
    %117 = vmatpush.msra.mxu0 0.0
    %118 = vmatpush.msra.mxu0 0.0
    %119 = vmatpush.msra.mxu0 %v53
    %120 = vmatpush.msra.mxu0 %v52
    %121 = vmatpush.msra.mxu0 %v51
    %122 = vmatpush.msra.mxu0 %v50
    %123 = vmatmul.f32.gmra.mxu0 %v105
    %v124 = vpop.f32.mrf.mxu0
    %v125 = vadd.f32 %v103, %v124
    %126 = vdwg.mxu0
    %v127 = vmul.f32 %v125, 0.35355338
    %v128 = vperm.slane %v66, 1
    %129 = vmatpush.msra.mxu0 0.0
    %130 = vmatpush.msra.mxu0 0.0
    %131 = vmatpush.msra.mxu0 0.0
    %132 = vmatpush.msra.mxu0 0.0
    %133 = vmatpush.msra.mxu0 0.0
    %134 = vmatpush.msra.mxu0 0.0
    %135 = vmatpush.msra.mxu0 0.0
    %136 = vmatpush.msra.mxu0 0.0
    %137 = vmatpush.msra.mxu0 0.0
    %138 = vmatpush.msra.mxu0 0.0
    %139 = vmatpush.msra.mxu0 0.0
    %140 = vmatpush.msra.mxu0 0.0
    %141 = vmatpush.msra.mxu0 %v57
    %142 = vmatpush.msra.mxu0 %v56
    %143 = vmatpush.msra.mxu0 %v55
    %144 = vmatpush.msra.mxu0 %v54
    %145 = vmatmul.f32.gmra.mxu0 %v105
    %v146 = vpop.f32.mrf.mxu0
    %v147 = vadd.f32 %v128, %v146
    %148 = vdwg.mxu0
    %v149 = vperm.slane %v66, 2
    %150 = vmatpush.msra.mxu0 0.0
    %151 = vmatpush.msra.mxu0 0.0
    %152 = vmatpush.msra.mxu0 0.0
    %153 = vmatpush.msra.mxu0 0.0
    %154 = vmatpush.msra.mxu0 0.0
    %155 = vmatpush.msra.mxu0 0.0
    %156 = vmatpush.msra.mxu0 0.0
    %157 = vmatpush.msra.mxu0 0.0
    %158 = vmatpush.msra.mxu0 0.0
    %159 = vmatpush.msra.mxu0 0.0
    %160 = vmatpush.msra.mxu0 0.0
    %161 = vmatpush.msra.mxu0 0.0
    %162 = vmatpush.msra.mxu0 %v61
    %163 = vmatpush.msra.mxu0 %v60
    %164 = vmatpush.msra.mxu0 %v59
    %165 = vmatpush.msra.mxu0 %v58
    %166 = vmatmul.f32.gmra.mxu0 %v105
    %v167 = vpop.f32.mrf.mxu0
    %v168 = vadd.f32 %v149, %v167
    %169 = vdwg.mxu0
    %171 = vrot.lane.b32.xlu0 %v127, 120
    %v172 = vpop.permute.xlu0 %171
    %174 = vrot.lane.b32.xlu0 %v127, 112
    %v175 = vpop.permute.xlu0 %174
    %177 = vrot.lane.b32.xlu0 %v127, 104
    %v178 = vpop.permute.xlu0 %177
    %v180 = vrot.slane %v175, 4
    %vm181 = vcmask 1047556
    %v182 = vsel %vm181, %v180, %v127
    %v183 = vrot.slane %v127, 4
    %v184 = vsel %vm181, %v175, %v183
    %v186 = vunpack.c.l.s4 1983009808
    %v187 = vunpack.c.0.s8 %v186
    %v188 = vperm.slane %v182, %v187
    %v190 = vunpack.c.l.s4 1983009808
    %v191 = vunpack.c.0.s8 %v190
    %v192 = vperm.slane %v184, %v191
    %v193 = vrot.slane %v178, 4
    %v194 = vsel %vm181, %v193, %v172
    %v195 = vrot.slane %v172, 4
    %v196 = vsel %vm181, %v178, %v195
    %v198 = vunpack.c.l.s4 1983009808
    %v199 = vunpack.c.0.s8 %v198
    %v200 = vperm.slane %v194, %v199
    %v202 = vunpack.c.l.s4 1983009808
    %v203 = vunpack.c.0.s8 %v202
    %v204 = vperm.slane %v196, %v203
    %v205 = vrot.slane %v200, 4
    %v206 = vsel %vm181, %v205, %v188
    %v207 = vrot.slane %v188, 4
    %v208 = vsel %vm181, %v200, %v207
    %v210 = vunpack.c.l.s4 1934713408
    %v211 = vunpack.c.0.s8 %v210
    %v212 = vperm.slane %v206, %v211
    %v214 = vunpack.c.l.s4 1934713408
    %v215 = vunpack.c.0.s8 %v214
    %v216 = vperm.slane %v208, %v215
    %v217 = vrot.slane %v204, 4
    %v218 = vsel %vm181, %v217, %v192
    %v219 = vrot.slane %v192, 4
    %v220 = vsel %vm181, %v204, %v219
    %v222 = vunpack.c.l.s4 1934713408
    %v223 = vunpack.c.0.s8 %v222
    %v224 = vperm.slane %v218, %v223
    %v226 = vunpack.c.l.s4 1934713408
    %v227 = vunpack.c.0.s8 %v226
    %v228 = vperm.slane %v220, %v227
    %v229 = vrot.slane %v212, 4
    %v230 = vsel %vm181, 0.0, %v229
    %v231 = vrot.slane %v216, 4
    %v232 = vsel %vm181, 0.0, %v231
    %v233 = vrot.slane %v224, 4
    %v234 = vsel %vm181, 0.0, %v233
    %v235 = vrot.slane %v228, 4
    %v236 = vsel %vm181, 0.0, %v235
    %v237 = vsel %vm181, %v231, %v212
    %v239 = vunpack.c.l.s4 1983009808
    %v240 = vunpack.c.0.s8 %v239
    %v241 = vperm.slane %v237, %v240
    %v242 = vrot.slane %v232, 4
    %v243 = vsel %vm181, %v242, %v230
    %v245 = vunpack.c.l.s4 1983009808
    %v246 = vunpack.c.0.s8 %v245
    %v247 = vperm.slane %v243, %v246
    %v248 = vsel %vm181, %v235, %v224
    %v250 = vunpack.c.l.s4 1983009808
    %v251 = vunpack.c.0.s8 %v250
    %v252 = vperm.slane %v248, %v251
    %v253 = vrot.slane %v236, 4
    %v254 = vsel %vm181, %v253, %v234
    %v256 = vunpack.c.l.s4 1983009808
    %v257 = vunpack.c.0.s8 %v256
    %v258 = vperm.slane %v254, %v257
    %v259 = vrot.slane %v247, 4
    %v260 = vsel %vm181, %v259, %v241
    %v261 = vrot.slane %v241, 4
    %v262 = vsel %vm181, %v247, %v261
    %v264 = vunpack.c.l.s4 1934713408
    %v265 = vunpack.c.0.s8 %v264
    %v266 = vperm.slane %v260, %v265
    %v268 = vunpack.c.l.s4 1934713408
    %v269 = vunpack.c.0.s8 %v268
    %v270 = vperm.slane %v262, %v269
    %v271 = vrot.slane %v258, 4
    %v272 = vsel %vm181, %v271, %v252
    %v273 = vrot.slane %v252, 4
    %v274 = vsel %vm181, %v258, %v273
    %v276 = vunpack.c.l.s4 1934713408
    %v277 = vunpack.c.0.s8 %v276
    %v278 = vperm.slane %v272, %v277
    %v280 = vunpack.c.l.s4 1934713408
    %v281 = vunpack.c.0.s8 %v280
    %v282 = vperm.slane %v274, %v281
    %v283 = vrot.slane %v278, 4
    %v284 = vsel %vm181, %v283, %v266
    %v285 = vrot.slane %v266, 4
    %v286 = vsel %vm181, %v278, %v285
    %v287 = vrot.slane %v282, 4
    %v288 = vsel %vm181, %v287, %v270
    %v289 = vrot.slane %v270, 4
    %v290 = vsel %vm181, %v282, %v289
    %292 = vrot.lane.b32.xlu0 %v147, 120
    %v293 = vpop.permute.xlu0 %292
    %295 = vrot.lane.b32.xlu0 %v147, 112
    %v296 = vpop.permute.xlu0 %295
    %298 = vrot.lane.b32.xlu0 %v147, 104
    %v299 = vpop.permute.xlu0 %298
    %v301 = vrot.slane %v296, 4
    %v302 = vsel %vm181, %v301, %v147
    %v303 = vrot.slane %v147, 4
    %v304 = vsel %vm181, %v296, %v303
    %v306 = vunpack.c.l.s4 1983009808
    %v307 = vunpack.c.0.s8 %v306
    %v308 = vperm.slane %v302, %v307
    %v310 = vunpack.c.l.s4 1983009808
    %v311 = vunpack.c.0.s8 %v310
    %v312 = vperm.slane %v304, %v311
    %v313 = vrot.slane %v299, 4
    %v314 = vsel %vm181, %v313, %v293
    %v315 = vrot.slane %v293, 4
    %v316 = vsel %vm181, %v299, %v315
    %v318 = vunpack.c.l.s4 1983009808
    %v319 = vunpack.c.0.s8 %v318
    %v320 = vperm.slane %v314, %v319
    %v322 = vunpack.c.l.s4 1983009808
    %v323 = vunpack.c.0.s8 %v322
    %v324 = vperm.slane %v316, %v323
    %v325 = vrot.slane %v320, 4
    %v326 = vsel %vm181, %v325, %v308
    %v327 = vrot.slane %v308, 4
    %v328 = vsel %vm181, %v320, %v327
    %v330 = vunpack.c.l.s4 1934713408
    %v331 = vunpack.c.0.s8 %v330
    %v332 = vperm.slane %v326, %v331
    %v334 = vunpack.c.l.s4 1934713408
    %v335 = vunpack.c.0.s8 %v334
    %v336 = vperm.slane %v328, %v335
    %v337 = vrot.slane %v324, 4
    %v338 = vsel %vm181, %v337, %v312
    %v339 = vrot.slane %v312, 4
    %v340 = vsel %vm181, %v324, %v339
    %v342 = vunpack.c.l.s4 1934713408
    %v343 = vunpack.c.0.s8 %v342
    %v344 = vperm.slane %v338, %v343
    %v346 = vunpack.c.l.s4 1934713408
    %v347 = vunpack.c.0.s8 %v346
    %v348 = vperm.slane %v340, %v347
    %v349 = vrot.slane %v332, 4
    %v350 = vsel %vm181, 0.0, %v349
    %v351 = vrot.slane %v336, 4
    %v352 = vsel %vm181, 0.0, %v351
    %v353 = vrot.slane %v344, 4
    %v354 = vsel %vm181, 0.0, %v353
    %v355 = vrot.slane %v348, 4
    %v356 = vsel %vm181, 0.0, %v355
    %v357 = vsel %vm181, %v351, %v332
    %v359 = vunpack.c.l.s4 1983009808
    %v360 = vunpack.c.0.s8 %v359
    %v361 = vperm.slane %v357, %v360
    %v362 = vrot.slane %v352, 4
    %v363 = vsel %vm181, %v362, %v350
    %v365 = vunpack.c.l.s4 1983009808
    %v366 = vunpack.c.0.s8 %v365
    %v367 = vperm.slane %v363, %v366
    %v368 = vsel %vm181, %v355, %v344
    %v370 = vunpack.c.l.s4 1983009808
    %v371 = vunpack.c.0.s8 %v370
    %v372 = vperm.slane %v368, %v371
    %v373 = vrot.slane %v356, 4
    %v374 = vsel %vm181, %v373, %v354
    %v376 = vunpack.c.l.s4 1983009808
    %v377 = vunpack.c.0.s8 %v376
    %v378 = vperm.slane %v374, %v377
    %v379 = vrot.slane %v367, 4
    %v380 = vsel %vm181, %v379, %v361
    %v381 = vrot.slane %v361, 4
    %v382 = vsel %vm181, %v367, %v381
    %v384 = vunpack.c.l.s4 1934713408
    %v385 = vunpack.c.0.s8 %v384
    %v386 = vperm.slane %v380, %v385
    %v388 = vunpack.c.l.s4 1934713408
    %v389 = vunpack.c.0.s8 %v388
    %v390 = vperm.slane %v382, %v389
    %v391 = vrot.slane %v378, 4
    %v392 = vsel %vm181, %v391, %v372
    %v393 = vrot.slane %v372, 4
    %v394 = vsel %vm181, %v378, %v393
    %v396 = vunpack.c.l.s4 1934713408
    %v397 = vunpack.c.0.s8 %v396
    %v398 = vperm.slane %v392, %v397
    %v400 = vunpack.c.l.s4 1934713408
    %v401 = vunpack.c.0.s8 %v400
    %v402 = vperm.slane %v394, %v401
    %v403 = vrot.slane %v398, 4
    %v404 = vsel %vm181, %v403, %v386
    %v405 = vrot.slane %v386, 4
    %v406 = vsel %vm181, %v398, %v405
    %v407 = vrot.slane %v402, 4
    %v408 = vsel %vm181, %v407, %v390
    %v409 = vrot.slane %v390, 4
    %v410 = vsel %vm181, %v402, %v409
    %412 = vrot.lane.b32.xlu0 %v168, 120
    %v413 = vpop.permute.xlu0 %412
    %415 = vrot.lane.b32.xlu0 %v168, 112
    %v416 = vpop.permute.xlu0 %415
    %418 = vrot.lane.b32.xlu0 %v168, 104
    %v419 = vpop.permute.xlu0 %418
    %v421 = vrot.slane %v416, 4
    %v422 = vsel %vm181, %v421, %v168
    %v423 = vrot.slane %v168, 4
    %v424 = vsel %vm181, %v416, %v423
    %v426 = vunpack.c.l.s4 1983009808
    %v427 = vunpack.c.0.s8 %v426
    %v428 = vperm.slane %v422, %v427
    %v430 = vunpack.c.l.s4 1983009808
    %v431 = vunpack.c.0.s8 %v430
    %v432 = vperm.slane %v424, %v431
    %v433 = vrot.slane %v419, 4
    %v434 = vsel %vm181, %v433, %v413
    %v435 = vrot.slane %v413, 4
    %v436 = vsel %vm181, %v419, %v435
    %v438 = vunpack.c.l.s4 1983009808
    %v439 = vunpack.c.0.s8 %v438
    %v440 = vperm.slane %v434, %v439
    %v442 = vunpack.c.l.s4 1983009808
    %v443 = vunpack.c.0.s8 %v442
    %v444 = vperm.slane %v436, %v443
    %v445 = vrot.slane %v440, 4
    %v446 = vsel %vm181, %v445, %v428
    %v447 = vrot.slane %v428, 4
    %v448 = vsel %vm181, %v440, %v447
    %v450 = vunpack.c.l.s4 1934713408
    %v451 = vunpack.c.0.s8 %v450
    %v452 = vperm.slane %v446, %v451
    %v454 = vunpack.c.l.s4 1934713408
    %v455 = vunpack.c.0.s8 %v454
    %v456 = vperm.slane %v448, %v455
    %v457 = vrot.slane %v444, 4
    %v458 = vsel %vm181, %v457, %v432
    %v459 = vrot.slane %v432, 4
    %v460 = vsel %vm181, %v444, %v459
    %v462 = vunpack.c.l.s4 1934713408
    %v463 = vunpack.c.0.s8 %v462
    %v464 = vperm.slane %v458, %v463
    %v466 = vunpack.c.l.s4 1934713408
    %v467 = vunpack.c.0.s8 %v466
    %v468 = vperm.slane %v460, %v467
    %v469 = vrot.slane %v452, 4
    %v470 = vsel %vm181, 0.0, %v469
    %v471 = vrot.slane %v456, 4
    %v472 = vsel %vm181, 0.0, %v471
    %v473 = vrot.slane %v464, 4
    %v474 = vsel %vm181, 0.0, %v473
    %v475 = vrot.slane %v468, 4
    %v476 = vsel %vm181, 0.0, %v475
    %v477 = vsel %vm181, %v471, %v452
    %v479 = vunpack.c.l.s4 1983009808
    %v480 = vunpack.c.0.s8 %v479
    %v481 = vperm.slane %v477, %v480
    %v482 = vrot.slane %v472, 4
    %v483 = vsel %vm181, %v482, %v470
    %v485 = vunpack.c.l.s4 1983009808
    %v486 = vunpack.c.0.s8 %v485
    %v487 = vperm.slane %v483, %v486
    %v488 = vsel %vm181, %v475, %v464
    %v490 = vunpack.c.l.s4 1983009808
    %v491 = vunpack.c.0.s8 %v490
    %v492 = vperm.slane %v488, %v491
    %v493 = vrot.slane %v476, 4
    %v494 = vsel %vm181, %v493, %v474
    %v496 = vunpack.c.l.s4 1983009808
    %v497 = vunpack.c.0.s8 %v496
    %v498 = vperm.slane %v494, %v497
    %v499 = vrot.slane %v487, 4
    %v500 = vsel %vm181, %v499, %v481
    %v501 = vrot.slane %v481, 4
    %v502 = vsel %vm181, %v487, %v501
    %v504 = vunpack.c.l.s4 1934713408
    %v505 = vunpack.c.0.s8 %v504
    %v506 = vperm.slane %v500, %v505
    %v508 = vunpack.c.l.s4 1934713408
    %v509 = vunpack.c.0.s8 %v508
    %v510 = vperm.slane %v502, %v509
    %v511 = vrot.slane %v498, 4
    %v512 = vsel %vm181, %v511, %v492
    %v513 = vrot.slane %v492, 4
    %v514 = vsel %vm181, %v498, %v513
    %v516 = vunpack.c.l.s4 1934713408
    %v517 = vunpack.c.0.s8 %v516
    %v518 = vperm.slane %v512, %v517
    %v520 = vunpack.c.l.s4 1934713408
    %v521 = vunpack.c.0.s8 %v520
    %v522 = vperm.slane %v514, %v521
    %v523 = vrot.slane %v518, 4
    %v524 = vsel %vm181, %v523, %v506
    %v525 = vrot.slane %v506, 4
    %v526 = vsel %vm181, %v518, %v525
    %v527 = vrot.slane %v522, 4
    %v528 = vsel %vm181, %v527, %v510
    %v529 = vrot.slane %v510, 4
    %v530 = vsel %vm181, %v522, %v529
    %vm531 = vcmask 64512
    %v533 = vsel %vm531, %v284, 0
    %v536 = vsel %vm531, %v404, 0
    %538 = vmatpush.xpose.msra.mxu0 0.0
    %539 = vmatpush.xpose.msra.mxu0 0.0
    %540 = vmatpush.xpose.msra.mxu0 0.0
    %541 = vmatpush.xpose.msra.mxu0 0.0
    %542 = vmatpush.xpose.msra.mxu0 0.0
    %543 = vmatpush.xpose.msra.mxu0 0.0
    %544 = vmatpush.xpose.msra.mxu0 0.0
    %545 = vmatpush.xpose.msra.mxu0 0.0
    %546 = vmatpush.xpose.msra.mxu0 0.0
    %547 = vmatpush.xpose.msra.mxu0 0.0
    %548 = vmatpush.xpose.msra.mxu0 0.0
    %549 = vmatpush.xpose.msra.mxu0 0.0
    %550 = vmatpush.xpose.msra.mxu0 0.0
    %551 = vmatpush.xpose.msra.mxu0 0.0
    %552 = vmatpush.xpose.msra.mxu0 0.0
    %553 = vmatpush.xpose.msra.mxu0 %v536
    %554 = vmatmul.f32.gmra.mxu0 %v533
    %v555 = vpop.f32.mrf.mxu0
    %v556 = vadd.f32 %v46, %v555
    %557 = vdwg.mxu0
    %v559 = vsel %vm531, %v286, 0
    %v562 = vsel %vm531, %v406, 0
    %564 = vmatpush.xpose.msra.mxu0 0.0
    %565 = vmatpush.xpose.msra.mxu0 0.0
    %566 = vmatpush.xpose.msra.mxu0 0.0
    %567 = vmatpush.xpose.msra.mxu0 0.0
    %568 = vmatpush.xpose.msra.mxu0 0.0
    %569 = vmatpush.xpose.msra.mxu0 0.0
    %570 = vmatpush.xpose.msra.mxu0 0.0
    %571 = vmatpush.xpose.msra.mxu0 0.0
    %572 = vmatpush.xpose.msra.mxu0 0.0
    %573 = vmatpush.xpose.msra.mxu0 0.0
    %574 = vmatpush.xpose.msra.mxu0 0.0
    %575 = vmatpush.xpose.msra.mxu0 0.0
    %576 = vmatpush.xpose.msra.mxu0 0.0
    %577 = vmatpush.xpose.msra.mxu0 0.0
    %578 = vmatpush.xpose.msra.mxu0 0.0
    %579 = vmatpush.xpose.msra.mxu0 %v562
    %580 = vmatmul.f32.gmra.mxu0 %v559
    %v581 = vpop.f32.mrf.mxu0
    %v582 = vadd.f32 %v47, %v581
    %583 = vdwg.mxu0
    %v585 = vsel %vm531, %v288, 0
    %v588 = vsel %vm531, %v408, 0
    %590 = vmatpush.xpose.msra.mxu0 0.0
    %591 = vmatpush.xpose.msra.mxu0 0.0
    %592 = vmatpush.xpose.msra.mxu0 0.0
    %593 = vmatpush.xpose.msra.mxu0 0.0
    %594 = vmatpush.xpose.msra.mxu0 0.0
    %595 = vmatpush.xpose.msra.mxu0 0.0
    %596 = vmatpush.xpose.msra.mxu0 0.0
    %597 = vmatpush.xpose.msra.mxu0 0.0
    %598 = vmatpush.xpose.msra.mxu0 0.0
    %599 = vmatpush.xpose.msra.mxu0 0.0
    %600 = vmatpush.xpose.msra.mxu0 0.0
    %601 = vmatpush.xpose.msra.mxu0 0.0
    %602 = vmatpush.xpose.msra.mxu0 0.0
    %603 = vmatpush.xpose.msra.mxu0 0.0
    %604 = vmatpush.xpose.msra.mxu0 0.0
    %605 = vmatpush.xpose.msra.mxu0 %v588
    %606 = vmatmul.f32.gmra.mxu0 %v585
    %v607 = vpop.f32.mrf.mxu0
    %v608 = vadd.f32 %v48, %v607
    %609 = vdwg.mxu0
    %v611 = vsel %vm531, %v290, 0
    %v614 = vsel %vm531, %v410, 0
    %616 = vmatpush.xpose.msra.mxu0 0.0
    %617 = vmatpush.xpose.msra.mxu0 0.0
    %618 = vmatpush.xpose.msra.mxu0 0.0
    %619 = vmatpush.xpose.msra.mxu0 0.0
    %620 = vmatpush.xpose.msra.mxu0 0.0
    %621 = vmatpush.xpose.msra.mxu0 0.0
    %622 = vmatpush.xpose.msra.mxu0 0.0
    %623 = vmatpush.xpose.msra.mxu0 0.0
    %624 = vmatpush.xpose.msra.mxu0 0.0
    %625 = vmatpush.xpose.msra.mxu0 0.0
    %626 = vmatpush.xpose.msra.mxu0 0.0
    %627 = vmatpush.xpose.msra.mxu0 0.0
    %628 = vmatpush.xpose.msra.mxu0 0.0
    %629 = vmatpush.xpose.msra.mxu0 0.0
    %630 = vmatpush.xpose.msra.mxu0 0.0
    %631 = vmatpush.xpose.msra.mxu0 %v614
    %632 = vmatmul.f32.gmra.mxu0 %v611
    %v633 = vpop.f32.mrf.mxu0
    %v634 = vadd.f32 %v49, %v633
    %635 = vdwg.mxu0
    %v636 = vsel %vm531, %v556, -inf
    %637 = vmax.xlane.f32.xlu0 %v636
    %v638 = vpop.xlane.xlu0 %637
    %v639 = vsel %vm531, %v582, -inf
    %640 = vmax.xlane.f32.xlu0 %v639
    %v641 = vpop.xlane.xlu0 %640
    %v642 = vsel %vm531, %v608, -inf
    %643 = vmax.xlane.f32.xlu0 %v642
    %v644 = vpop.xlane.xlu0 %643
    %v645 = vsel %vm531, %v634, -inf
    %646 = vmax.xlane.f32.xlu0 %v645
    %v647 = vpop.xlane.xlu0 %646
    %v648 = vsub.f32 %v556, %v638
    %v649 = vsub.f32 %v582, %v641
    %v650 = vsub.f32 %v608, %v644
    %v651 = vsub.f32 %v634, %v647
    %v652 = vmul.f32 %v648, 1.442695
    %v653 = vpow.pop %v652
    %v654 = vmul.f32 %v649, 1.442695
    %v655 = vpow.pop %v654
    %v656 = vmul.f32 %v650, 1.442695
    %v657 = vpow.pop %v656
    %v658 = vmul.f32 %v651, 1.442695
    %v659 = vpow.pop %v658
    %v660 = vsel %vm531, %v653, 0.0
    %661 = vadd.xlane.f32.xlu0 %v660
    %v662 = vpop.xlane.xlu0 %661
    %v663 = vsel %vm531, %v655, 0.0
    %664 = vadd.xlane.f32.xlu0 %v663
    %v665 = vpop.xlane.xlu0 %664
    %v666 = vsel %vm531, %v657, 0.0
    %667 = vadd.xlane.f32.xlu0 %v666
    %v668 = vpop.xlane.xlu0 %667
    %v669 = vsel %vm531, %v659, 0.0
    %670 = vadd.xlane.f32.xlu0 %v669
    %v671 = vpop.xlane.xlu0 %670
    %v672 = vrcp.pop %v662
    %v673 = vrcp.pop %v665
    %v674 = vrcp.pop %v668
    %v675 = vrcp.pop %v671
    %v676 = vmul.f32 %v653, %v672
    %v677 = vmul.f32 %v655, %v673
    %v678 = vmul.f32 %v657, %v674
    %v679 = vmul.f32 %v659, %v675
    %v681 = vsel %vm531, %v676, 0
    %683 = vmatpush.msra.mxu0 0.0
    %684 = vmatpush.msra.mxu0 0.0
    %685 = vmatpush.msra.mxu0 0.0
    %686 = vmatpush.msra.mxu0 0.0
    %687 = vmatpush.msra.mxu0 0.0
    %688 = vmatpush.msra.mxu0 0.0
    %689 = vmatpush.msra.mxu0 0.0
    %690 = vmatpush.msra.mxu0 0.0
    %691 = vmatpush.msra.mxu0 0.0
    %692 = vmatpush.msra.mxu0 0.0
    %693 = vmatpush.msra.mxu0 0.0
    %694 = vmatpush.msra.mxu0 0.0
    %695 = vmatpush.msra.mxu0 0.0
    %696 = vmatpush.msra.mxu0 0.0
    %697 = vmatpush.msra.mxu0 0.0
    %698 = vmatpush.msra.mxu0 %v524
    %699 = vmatmul.f32.gmra.mxu0 %v681
    %v700 = vpop.f32.mrf.mxu0
    %v701 = vadd.f32 0.0, %v700
    %702 = vdwg.mxu0
    %v704 = vsel %vm531, %v677, 0
    %706 = vmatpush.msra.mxu0 0.0
    %707 = vmatpush.msra.mxu0 0.0
    %708 = vmatpush.msra.mxu0 0.0
    %709 = vmatpush.msra.mxu0 0.0
    %710 = vmatpush.msra.mxu0 0.0
    %711 = vmatpush.msra.mxu0 0.0
    %712 = vmatpush.msra.mxu0 0.0
    %713 = vmatpush.msra.mxu0 0.0
    %714 = vmatpush.msra.mxu0 0.0
    %715 = vmatpush.msra.mxu0 0.0
    %716 = vmatpush.msra.mxu0 0.0
    %717 = vmatpush.msra.mxu0 0.0
    %718 = vmatpush.msra.mxu0 0.0
    %719 = vmatpush.msra.mxu0 0.0
    %720 = vmatpush.msra.mxu0 0.0
    %721 = vmatpush.msra.mxu0 %v526
    %722 = vmatmul.f32.gmra.mxu0 %v704
    %v723 = vpop.f32.mrf.mxu0
    %v724 = vadd.f32 0.0, %v723
    %725 = vdwg.mxu0
    %v727 = vsel %vm531, %v678, 0
    %729 = vmatpush.msra.mxu0 0.0
    %730 = vmatpush.msra.mxu0 0.0
    %731 = vmatpush.msra.mxu0 0.0
    %732 = vmatpush.msra.mxu0 0.0
    %733 = vmatpush.msra.mxu0 0.0
    %734 = vmatpush.msra.mxu0 0.0
    %735 = vmatpush.msra.mxu0 0.0
    %736 = vmatpush.msra.mxu0 0.0
    %737 = vmatpush.msra.mxu0 0.0
    %738 = vmatpush.msra.mxu0 0.0
    %739 = vmatpush.msra.mxu0 0.0
    %740 = vmatpush.msra.mxu0 0.0
    %741 = vmatpush.msra.mxu0 0.0
    %742 = vmatpush.msra.mxu0 0.0
    %743 = vmatpush.msra.mxu0 0.0
    %744 = vmatpush.msra.mxu0 %v528
    %745 = vmatmul.f32.gmra.mxu0 %v727
    %v746 = vpop.f32.mrf.mxu0
    %v747 = vadd.f32 0.0, %v746
    %748 = vdwg.mxu0
    %v750 = vsel %vm531, %v679, 0
    %752 = vmatpush.msra.mxu0 0.0
    %753 = vmatpush.msra.mxu0 0.0
    %754 = vmatpush.msra.mxu0 0.0
    %755 = vmatpush.msra.mxu0 0.0
    %756 = vmatpush.msra.mxu0 0.0
    %757 = vmatpush.msra.mxu0 0.0
    %758 = vmatpush.msra.mxu0 0.0
    %759 = vmatpush.msra.mxu0 0.0
    %760 = vmatpush.msra.mxu0 0.0
    %761 = vmatpush.msra.mxu0 0.0
    %762 = vmatpush.msra.mxu0 0.0
    %763 = vmatpush.msra.mxu0 0.0
    %764 = vmatpush.msra.mxu0 0.0
    %765 = vmatpush.msra.mxu0 0.0
    %766 = vmatpush.msra.mxu0 0.0
    %767 = vmatpush.msra.mxu0 %v530
    %768 = vmatmul.f32.gmra.mxu0 %v750
    %v769 = vpop.f32.mrf.mxu0
    %v770 = vadd.f32 0.0, %v769
    %771 = vdwg.mxu0
    %v772 = vrot.slane %v747, 4
    %v773 = vsel %vm181, %v772, %v701
    %v774 = vrot.slane %v701, 4
    %v775 = vsel %vm181, %v747, %v774
    %v777 = vunpack.c.l.s4 1983009808
    %v778 = vunpack.c.0.s8 %v777
    %v779 = vperm.slane %v773, %v778
    %v781 = vunpack.c.l.s4 1983009808
    %v782 = vunpack.c.0.s8 %v781
    %v783 = vperm.slane %v775, %v782
    %v784 = vrot.slane %v770, 4
    %v785 = vsel %vm181, %v784, %v724
    %v786 = vrot.slane %v724, 4
    %v787 = vsel %vm181, %v770, %v786
    %v789 = vunpack.c.l.s4 1983009808
    %v790 = vunpack.c.0.s8 %v789
    %v791 = vperm.slane %v785, %v790
    %v793 = vunpack.c.l.s4 1983009808
    %v794 = vunpack.c.0.s8 %v793
    %v795 = vperm.slane %v787, %v794
    %v796 = vrot.slane %v791, 4
    %v797 = vsel %vm181, %v796, %v779
    %v798 = vrot.slane %v779, 4
    %v799 = vsel %vm181, %v791, %v798
    %v801 = vunpack.c.l.s4 1934713408
    %v802 = vunpack.c.0.s8 %v801
    %v803 = vperm.slane %v797, %v802
    %v805 = vunpack.c.l.s4 1934713408
    %v806 = vunpack.c.0.s8 %v805
    %v807 = vperm.slane %v799, %v806
    %v808 = vrot.slane %v795, 4
    %v809 = vsel %vm181, %v808, %v783
    %v810 = vrot.slane %v783, 4
    %v811 = vsel %vm181, %v795, %v810
    %v813 = vunpack.c.l.s4 1934713408
    %v814 = vunpack.c.0.s8 %v813
    %v815 = vperm.slane %v809, %v814
    %v817 = vunpack.c.l.s4 1934713408
    %v818 = vunpack.c.0.s8 %v817
    %v819 = vperm.slane %v811, %v818
    %v820 = vrot.slane %v803, 4
    %v821 = vsel %vm181, 0.0, %v820
    %v822 = vrot.slane %v807, 4
    %v823 = vsel %vm181, 0.0, %v822
    %v824 = vrot.slane %v815, 4
    %v825 = vsel %vm181, 0.0, %v824
    %v826 = vrot.slane %v819, 4
    %v827 = vsel %vm181, 0.0, %v826
    %v828 = vsel %vm181, %v822, %v803
    %v830 = vunpack.c.l.s4 1983009808
    %v831 = vunpack.c.0.s8 %v830
    %v832 = vperm.slane %v828, %v831
    %v833 = vrot.slane %v823, 4
    %v834 = vsel %vm181, %v833, %v821
    %v836 = vunpack.c.l.s4 1983009808
    %v837 = vunpack.c.0.s8 %v836
    %v838 = vperm.slane %v834, %v837
    %v839 = vsel %vm181, %v826, %v815
    %v841 = vunpack.c.l.s4 1983009808
    %v842 = vunpack.c.0.s8 %v841
    %v843 = vperm.slane %v839, %v842
    %v844 = vrot.slane %v827, 4
    %v845 = vsel %vm181, %v844, %v825
    %v847 = vunpack.c.l.s4 1983009808
    %v848 = vunpack.c.0.s8 %v847
    %v849 = vperm.slane %v845, %v848
    %v850 = vrot.slane %v838, 4
    %v851 = vsel %vm181, %v850, %v832
    %v852 = vrot.slane %v832, 4
    %v853 = vsel %vm181, %v838, %v852
    %v855 = vunpack.c.l.s4 1934713408
    %v856 = vunpack.c.0.s8 %v855
    %v857 = vperm.slane %v851, %v856
    %v859 = vunpack.c.l.s4 1934713408
    %v860 = vunpack.c.0.s8 %v859
    %v861 = vperm.slane %v853, %v860
    %v862 = vrot.slane %v849, 4
    %v863 = vsel %vm181, %v862, %v843
    %v864 = vrot.slane %v843, 4
    %v865 = vsel %vm181, %v849, %v864
    %v867 = vunpack.c.l.s4 1934713408
    %v868 = vunpack.c.0.s8 %v867
    %v869 = vperm.slane %v863, %v868
    %v871 = vunpack.c.l.s4 1934713408
    %v872 = vunpack.c.0.s8 %v871
    %v873 = vperm.slane %v865, %v872
    %v874 = vrot.slane %v869, 4
    %v875 = vsel %vm181, %v874, %v857
    %v876 = vrot.slane %v857, 4
    %v877 = vsel %vm181, %v869, %v876
    %v878 = vrot.slane %v873, 4
    %v879 = vsel %vm181, %v878, %v861
    %v880 = vrot.slane %v861, 4
    %v881 = vsel %vm181, %v873, %v880
    %883 = vrot.lane.b32.xlu0 %v877, 8
    %v884 = vpop.permute.xlu0 %883
    %887 = vrot.lane.b32.xlu0 %v879, 16
    %v888 = vpop.permute.xlu0 %887
    %891 = vrot.lane.b32.xlu0 %v881, 24
    %v892 = vpop.permute.xlu0 %891
    %v894 = vsel %vm531, %v875, %v884
    %vm895 = vcmask 130048
    %v896 = vsel %vm895, %v894, %v888
    %vm897 = vcmask 195584
    %v898 = vsel %vm897, %v896, %v892
    %v899 = vperm.slane %v66, 3
    %v901 = vsel %vm69, %v898, 0
    %903 = vmatpush.msra.mxu0 0.0
    %904 = vmatpush.msra.mxu0 0.0
    %905 = vmatpush.msra.mxu0 0.0
    %906 = vmatpush.msra.mxu0 0.0
    %907 = vmatpush.msra.mxu0 0.0
    %908 = vmatpush.msra.mxu0 0.0
    %909 = vmatpush.msra.mxu0 0.0
    %910 = vmatpush.msra.mxu0 0.0
    %911 = vmatpush.msra.mxu0 0.0
    %912 = vmatpush.msra.mxu0 0.0
    %913 = vmatpush.msra.mxu0 0.0
    %914 = vmatpush.msra.mxu0 0.0
    %915 = vmatpush.msra.mxu0 %v65
    %916 = vmatpush.msra.mxu0 %v64
    %917 = vmatpush.msra.mxu0 %v63
    %918 = vmatpush.msra.mxu0 %v62
    %919 = vmatmul.f32.gmra.mxu0 %v901
    %v920 = vpop.f32.mrf.mxu0
    %v921 = vadd.f32 %v899, %v920
    %922 = vdwg.mxu0
    %v923 = vadd.f32 %v45, %v921
    %v924 = vsel %vm69, %v923, 0.0
    %925 = vadd.xlane.f32.xlu0 %v924
    %v926 = vpop.xlane.xlu0 %925
    %v927 = vmul.f32 %v926, %v79
    %v928 = vsub.f32 %v923, %v927
    %v929 = vmul.f32 %v928, %v928
    %v930 = vsel %vm69, %v929, 0.0
    %931 = vadd.xlane.f32.xlu0 %v930
    %v932 = vpop.xlane.xlu0 %931
    %v933 = vmul.f32 %v932, %v79
    %v934 = vadd.f32 %v933, 1e-05
    %v935 = vrsqrt.pop %v934
    %v936 = vmul.f32 %v935, %v934
    %v937 = vmul.f32 %v936, %v935
    %v938 = vmul.f32 0.5, %v937
    %v939 = vsub.f32 1.5, %v938
    %v940 = vmul.f32 %v935, %v939
    %vm941 = vweird.f32 %v934
    %vm942 = vweird.f32 %v935
    %vm943 = vmor %vm941, %vm942
    %v944 = vsel %vm943, %v935, %v940
    %v945 = vmul.f32 %v928, %v944
    %v946 = vperm.slane %v67, 1
    %v947 = vmul.f32 %v945, %v946
    %v948 = vperm.slane %v68, 1
    %v949 = vadd.f32 %v947, %v948
    %v950 = vld [vmem:[%s6] sm:$0xff]
    %v951 = vld [vmem:[%s6 + $0x8] sm:$0xff]
    %v952 = vld [vmem:[%s6 + $0x10] sm:$0xff]
    %v953 = vld [vmem:[%s6 + $0x18] sm:$0xff]
    %v954 = vld [vmem:[%s7] sm:$0x1]
    %v956 = vperm.slane %v954, 0
    %v959 = vsel %vm69, %v949, 0
    %961 = vmatpush.msra.mxu0 0.0
    %962 = vmatpush.msra.mxu0 0.0
    %963 = vmatpush.msra.mxu0 0.0
    %964 = vmatpush.msra.mxu0 0.0
    %965 = vmatpush.msra.mxu0 0.0
    %966 = vmatpush.msra.mxu0 0.0
    %967 = vmatpush.msra.mxu0 0.0
    %968 = vmatpush.msra.mxu0 0.0
    %969 = vmatpush.msra.mxu0 0.0
    %970 = vmatpush.msra.mxu0 0.0
    %971 = vmatpush.msra.mxu0 0.0
    %972 = vmatpush.msra.mxu0 0.0
    %973 = vmatpush.msra.mxu0 %v953
    %974 = vmatpush.msra.mxu0 %v952
    %975 = vmatpush.msra.mxu0 %v951
    %976 = vmatpush.msra.mxu0 %v950
    %977 = vmatmul.f32.gmra.mxu0 %v959
    %v978 = vpop.f32.mrf.mxu0
    %v979 = vadd.f32 %v956, %v978
    %980 = vdwg.mxu0
    %v981 = vmul.f32 %v979, 0.5
    %v982 = vmul.f32 %v979, 0.70710677
    %v983 = vmul.f32 %v982, %v982
    %v984 = vmin.f32 16.0, %v983
    %v985 = vmul.f32 %v984, 2.1237322e-06
    %v986 = vadd.f32 %v985, 0.00028619796
    %v987 = vmul.f32 %v984, %v986
    %v988 = vadd.f32 %v987, 0.0036580483
    %v989 = vmul.f32 %v984, %v988
    %v990 = vadd.f32 %v989, 0.05243302
    %v991 = vmul.f32 %v984, %v990
    %v992 = vadd.f32 %v991, 0.18741608
    %v993 = vmul.f32 %v984, %v992
    %v994 = vadd.f32 %v993, 1.1283791
    %v995 = vmul.f32 %v982, %v994
    %v996 = vmul.f32 %v984, 3.8918573e-05
    %v997 = vadd.f32 %v996, 0.001143296
    %v998 = vmul.f32 %v984, %v997
    %v999 = vadd.f32 %v998, 0.014752088
    %v1000 = vmul.f32 %v984, %v999
    %v1001 = vadd.f32 %v1000, 0.112945676
    %v1002 = vmul.f32 %v984, %v1001
    %v1003 = vadd.f32 %v1002, 0.4994258
    %v1004 = vmul.f32 %v984, %v1003
    %v1005 = vadd.f32 %v1004, 1.0
    %v1006 = vrcp.pop %v1005
    %v1007 = vmul.f32 %v1005, %v1006
    %v1008 = vsub.f32 1.0, %v1007
    %v1009 = vmul.f32 %v1006, %v1008
    %v1010 = vadd.f32 %v1006, %v1009
    %vm1011 = vweird.f32 %v1005
    %vm1012 = vweird.f32 %v1006
    %vm1013 = vmor %vm1011, %vm1012
    %v1014 = vsel %vm1013, %v1006, %v1010
    %v1015 = vand.u32 2147483647, %v1005
    %vm1016 = vcmp.eq.f32.partialorder %v1015, 8.507059e+37
    %v1017 = vand.u32 %v1005, 2147483648
    %v1018 = vor.u32 1.1754944e-38, %v1017
    %v1019 = vsel %vm1016, %v1018, %v1014
    %v1020 = vmul.f32 %v995, %v1019
    %v1021 = vmin.f32 %v1020, 1.0
    %v1022 = vmax.f32 %v1021, -1.0
    %v1023 = vadd.f32 %v1022, 1.0
    %v1024 = vmul.f32 %v981, %v1023
    %v1025 = vld [vmem:[%s8] sm:$0xff]
    %v1026 = vld [vmem:[%s8 + $0x8] sm:$0xff]
    %v1027 = vld [vmem:[%s8 + $0x10] sm:$0xff]
    %v1028 = vld [vmem:[%s8 + $0x18] sm:$0xff]
    %v1029 = vld [vmem:[%s8 + $0x20] sm:$0xff]
    %v1030 = vld [vmem:[%s8 + $0x28] sm:$0xff]
    %v1031 = vld [vmem:[%s8 + $0x30] sm:$0xff]
    %v1032 = vld [vmem:[%s8 + $0x38] sm:$0xff]
    %v1033 = vld [vmem:[%s9] sm:$0x1]
    %v1035 = vperm.slane %v1033, 0
    %vm1037 = vcmask 523264
    %v1039 = vsel %vm1037, %v1024, 0
    %1041 = vmatpush.msra.mxu0 0.0
    %1042 = vmatpush.msra.mxu0 0.0
    %1043 = vmatpush.msra.mxu0 0.0
    %1044 = vmatpush.msra.mxu0 0.0
    %1045 = vmatpush.msra.mxu0 0.0
    %1046 = vmatpush.msra.mxu0 0.0
    %1047 = vmatpush.msra.mxu0 0.0
    %1048 = vmatpush.msra.mxu0 0.0
    %1049 = vmatpush.msra.mxu0 %v1032
    %1050 = vmatpush.msra.mxu0 %v1031
    %1051 = vmatpush.msra.mxu0 %v1030
    %1052 = vmatpush.msra.mxu0 %v1029
    %1053 = vmatpush.msra.mxu0 %v1028
    %1054 = vmatpush.msra.mxu0 %v1027
    %1055 = vmatpush.msra.mxu0 %v1026
    %1056 = vmatpush.msra.mxu0 %v1025
    %1057 = vmatmul.f32.gmra.mxu0 %v1039
    %v1058 = vpop.f32.mrf.mxu0
    %v1059 = vadd.f32 %v1035, %v1058
    %1060 = vdwg.mxu0
    %v1061 = vadd.f32 %v923, %v1059
    %s1062 = scalar_lea.vmem %s2, 128
    %v1063 = vld [vmem:[%s1062] sm:$0xff]
    %v1064 = vld [vmem:[%s1062 + $0x8] sm:$0xff]
    %v1065 = vld [vmem:[%s1062 + $0x10] sm:$0xff]
    %v1066 = vld [vmem:[%s1062 + $0x18] sm:$0xff]
    %v1067 = vld [vmem:[%s1062 + $0x20] sm:$0xff]
    %v1068 = vld [vmem:[%s1062 + $0x28] sm:$0xff]
    %v1069 = vld [vmem:[%s1062 + $0x30] sm:$0xff]
    %v1070 = vld [vmem:[%s1062 + $0x38] sm:$0xff]
    %v1071 = vld [vmem:[%s1062 + $0x40] sm:$0xff]
    %v1072 = vld [vmem:[%s1062 + $0x48] sm:$0xff]
    %v1073 = vld [vmem:[%s1062 + $0x50] sm:$0xff]
    %v1074 = vld [vmem:[%s1062 + $0x58] sm:$0xff]
    %v1075 = vld [vmem:[%s1062 + $0x60] sm:$0xff]
    %v1076 = vld [vmem:[%s1062 + $0x68] sm:$0xff]
    %v1077 = vld [vmem:[%s1062 + $0x70] sm:$0xff]
    %v1078 = vld [vmem:[%s1062 + $0x78] sm:$0xff]
    %s1079 = scalar_lea.vmem %s3, 4
    %v1080 = vld [vmem:[%s1079] sm:$0xf]
    %s1081 = scalar_lea.vmem %s4, 2
    %v1082 = vld [vmem:[%s1081] sm:$0x3]
    %s1083 = scalar_lea.vmem %s5, 2
    %v1084 = vld [vmem:[%s1083] sm:$0x3]
    %v1085 = vsel %vm69, %v1061, 0.0
    %1086 = vadd.xlane.f32.xlu0 %v1085
    %v1087 = vpop.xlane.xlu0 %1086
    %v1088 = vmul.f32 %v1087, %v79
    %v1089 = vsub.f32 %v1061, %v1088
    %v1090 = vmul.f32 %v1089, %v1089
    %v1091 = vsel %vm69, %v1090, 0.0
    %1092 = vadd.xlane.f32.xlu0 %v1091
    %v1093 = vpop.xlane.xlu0 %1092
    %v1094 = vmul.f32 %v1093, %v79
    %v1095 = vadd.f32 %v1094, 1e-05
    %v1096 = vrsqrt.pop %v1095
    %v1097 = vmul.f32 %v1096, %v1095
    %v1098 = vmul.f32 %v1097, %v1096
    %v1099 = vmul.f32 0.5, %v1098
    %v1100 = vsub.f32 1.5, %v1099
    %v1101 = vmul.f32 %v1096, %v1100
    %vm1102 = vweird.f32 %v1095
    %vm1103 = vweird.f32 %v1096
    %vm1104 = vmor %vm1102, %vm1103
    %v1105 = vsel %vm1104, %v1096, %v1101
    %v1106 = vmul.f32 %v1089, %v1105
    %v1107 = vperm.slane %v1082, 0
    %v1108 = vmul.f32 %v1106, %v1107
    %v1109 = vperm.slane %v1084, 0
    %v1110 = vadd.f32 %v1108, %v1109
    %v1111 = vperm.slane %v1080, 0
    %v1113 = vsel %vm69, %v1110, 0
    %1115 = vmatpush.msra.mxu0 0.0
    %1116 = vmatpush.msra.mxu0 0.0
    %1117 = vmatpush.msra.mxu0 0.0
    %1118 = vmatpush.msra.mxu0 0.0
    %1119 = vmatpush.msra.mxu0 0.0
    %1120 = vmatpush.msra.mxu0 0.0
    %1121 = vmatpush.msra.mxu0 0.0
    %1122 = vmatpush.msra.mxu0 0.0
    %1123 = vmatpush.msra.mxu0 0.0
    %1124 = vmatpush.msra.mxu0 0.0
    %1125 = vmatpush.msra.mxu0 0.0
    %1126 = vmatpush.msra.mxu0 0.0
    %1127 = vmatpush.msra.mxu0 %v1066
    %1128 = vmatpush.msra.mxu0 %v1065
    %1129 = vmatpush.msra.mxu0 %v1064
    %1130 = vmatpush.msra.mxu0 %v1063
    %1131 = vmatmul.f32.gmra.mxu0 %v1113
    %v1132 = vpop.f32.mrf.mxu0
    %v1133 = vadd.f32 %v1111, %v1132
    %1134 = vdwg.mxu0
    %v1135 = vmul.f32 %v1133, 0.35355338
    %v1136 = vperm.slane %v1080, 1
    %1137 = vmatpush.msra.mxu0 0.0
    %1138 = vmatpush.msra.mxu0 0.0
    %1139 = vmatpush.msra.mxu0 0.0
    %1140 = vmatpush.msra.mxu0 0.0
    %1141 = vmatpush.msra.mxu0 0.0
    %1142 = vmatpush.msra.mxu0 0.0
    %1143 = vmatpush.msra.mxu0 0.0
    %1144 = vmatpush.msra.mxu0 0.0
    %1145 = vmatpush.msra.mxu0 0.0
    %1146 = vmatpush.msra.mxu0 0.0
    %1147 = vmatpush.msra.mxu0 0.0
    %1148 = vmatpush.msra.mxu0 0.0
    %1149 = vmatpush.msra.mxu0 %v1070
    %1150 = vmatpush.msra.mxu0 %v1069
    %1151 = vmatpush.msra.mxu0 %v1068
    %1152 = vmatpush.msra.mxu0 %v1067
    %1153 = vmatmul.f32.gmra.mxu0 %v1113
    %v1154 = vpop.f32.mrf.mxu0
    %v1155 = vadd.f32 %v1136, %v1154
    %1156 = vdwg.mxu0
    %v1157 = vperm.slane %v1080, 2
    %1158 = vmatpush.msra.mxu0 0.0
    %1159 = vmatpush.msra.mxu0 0.0
    %1160 = vmatpush.msra.mxu0 0.0
    %1161 = vmatpush.msra.mxu0 0.0
    %1162 = vmatpush.msra.mxu0 0.0
    %1163 = vmatpush.msra.mxu0 0.0
    %1164 = vmatpush.msra.mxu0 0.0
    %1165 = vmatpush.msra.mxu0 0.0
    %1166 = vmatpush.msra.mxu0 0.0
    %1167 = vmatpush.msra.mxu0 0.0
    %1168 = vmatpush.msra.mxu0 0.0
    %1169 = vmatpush.msra.mxu0 0.0
    %1170 = vmatpush.msra.mxu0 %v1074
    %1171 = vmatpush.msra.mxu0 %v1073
    %1172 = vmatpush.msra.mxu0 %v1072
    %1173 = vmatpush.msra.mxu0 %v1071
    %1174 = vmatmul.f32.gmra.mxu0 %v1113
    %v1175 = vpop.f32.mrf.mxu0
    %v1176 = vadd.f32 %v1157, %v1175
    %1177 = vdwg.mxu0
    %1179 = vrot.lane.b32.xlu0 %v1135, 120
    %v1180 = vpop.permute.xlu0 %1179
    %1182 = vrot.lane.b32.xlu0 %v1135, 112
    %v1183 = vpop.permute.xlu0 %1182
    %1185 = vrot.lane.b32.xlu0 %v1135, 104
    %v1186 = vpop.permute.xlu0 %1185
    %v1188 = vrot.slane %v1183, 4
    %v1189 = vsel %vm181, %v1188, %v1135
    %v1190 = vrot.slane %v1135, 4
    %v1191 = vsel %vm181, %v1183, %v1190
    %v1193 = vunpack.c.l.s4 1983009808
    %v1194 = vunpack.c.0.s8 %v1193
    %v1195 = vperm.slane %v1189, %v1194
    %v1197 = vunpack.c.l.s4 1983009808
    %v1198 = vunpack.c.0.s8 %v1197
    %v1199 = vperm.slane %v1191, %v1198
    %v1200 = vrot.slane %v1186, 4
    %v1201 = vsel %vm181, %v1200, %v1180
    %v1202 = vrot.slane %v1180, 4
    %v1203 = vsel %vm181, %v1186, %v1202
    %v1205 = vunpack.c.l.s4 1983009808
    %v1206 = vunpack.c.0.s8 %v1205
    %v1207 = vperm.slane %v1201, %v1206
    %v1209 = vunpack.c.l.s4 1983009808
    %v1210 = vunpack.c.0.s8 %v1209
    %v1211 = vperm.slane %v1203, %v1210
    %v1212 = vrot.slane %v1207, 4
    %v1213 = vsel %vm181, %v1212, %v1195
    %v1214 = vrot.slane %v1195, 4
    %v1215 = vsel %vm181, %v1207, %v1214
    %v1217 = vunpack.c.l.s4 1934713408
    %v1218 = vunpack.c.0.s8 %v1217
    %v1219 = vperm.slane %v1213, %v1218
    %v1221 = vunpack.c.l.s4 1934713408
    %v1222 = vunpack.c.0.s8 %v1221
    %v1223 = vperm.slane %v1215, %v1222
    %v1224 = vrot.slane %v1211, 4
    %v1225 = vsel %vm181, %v1224, %v1199
    %v1226 = vrot.slane %v1199, 4
    %v1227 = vsel %vm181, %v1211, %v1226
    %v1229 = vunpack.c.l.s4 1934713408
    %v1230 = vunpack.c.0.s8 %v1229
    %v1231 = vperm.slane %v1225, %v1230
    %v1233 = vunpack.c.l.s4 1934713408
    %v1234 = vunpack.c.0.s8 %v1233
    %v1235 = vperm.slane %v1227, %v1234
    %v1236 = vrot.slane %v1219, 4
    %v1237 = vsel %vm181, 0.0, %v1236
    %v1238 = vrot.slane %v1223, 4
    %v1239 = vsel %vm181, 0.0, %v1238
    %v1240 = vrot.slane %v1231, 4
    %v1241 = vsel %vm181, 0.0, %v1240
    %v1242 = vrot.slane %v1235, 4
    %v1243 = vsel %vm181, 0.0, %v1242
    %v1244 = vsel %vm181, %v1238, %v1219
    %v1246 = vunpack.c.l.s4 1983009808
    %v1247 = vunpack.c.0.s8 %v1246
    %v1248 = vperm.slane %v1244, %v1247
    %v1249 = vrot.slane %v1239, 4
    %v1250 = vsel %vm181, %v1249, %v1237
    %v1252 = vunpack.c.l.s4 1983009808
    %v1253 = vunpack.c.0.s8 %v1252
    %v1254 = vperm.slane %v1250, %v1253
    %v1255 = vsel %vm181, %v1242, %v1231
    %v1257 = vunpack.c.l.s4 1983009808
    %v1258 = vunpack.c.0.s8 %v1257
    %v1259 = vperm.slane %v1255, %v1258
    %v1260 = vrot.slane %v1243, 4
    %v1261 = vsel %vm181, %v1260, %v1241
    %v1263 = vunpack.c.l.s4 1983009808
    %v1264 = vunpack.c.0.s8 %v1263
    %v1265 = vperm.slane %v1261, %v1264
    %v1266 = vrot.slane %v1254, 4
    %v1267 = vsel %vm181, %v1266, %v1248
    %v1268 = vrot.slane %v1248, 4
    %v1269 = vsel %vm181, %v1254, %v1268
    %v1271 = vunpack.c.l.s4 1934713408
    %v1272 = vunpack.c.0.s8 %v1271
    %v1273 = vperm.slane %v1267, %v1272
    %v1275 = vunpack.c.l.s4 1934713408
    %v1276 = vunpack.c.0.s8 %v1275
    %v1277 = vperm.slane %v1269, %v1276
    %v1278 = vrot.slane %v1265, 4
    %v1279 = vsel %vm181, %v1278, %v1259
    %v1280 = vrot.slane %v1259, 4
    %v1281 = vsel %vm181, %v1265, %v1280
    %v1283 = vunpack.c.l.s4 1934713408
    %v1284 = vunpack.c.0.s8 %v1283
    %v1285 = vperm.slane %v1279, %v1284
    %v1287 = vunpack.c.l.s4 1934713408
    %v1288 = vunpack.c.0.s8 %v1287
    %v1289 = vperm.slane %v1281, %v1288
    %v1290 = vrot.slane %v1285, 4
    %v1291 = vsel %vm181, %v1290, %v1273
    %v1292 = vrot.slane %v1273, 4
    %v1293 = vsel %vm181, %v1285, %v1292
    %v1294 = vrot.slane %v1289, 4
    %v1295 = vsel %vm181, %v1294, %v1277
    %v1296 = vrot.slane %v1277, 4
    %v1297 = vsel %vm181, %v1289, %v1296
    %1299 = vrot.lane.b32.xlu0 %v1155, 120
    %v1300 = vpop.permute.xlu0 %1299
    %1302 = vrot.lane.b32.xlu0 %v1155, 112
    %v1303 = vpop.permute.xlu0 %1302
    %1305 = vrot.lane.b32.xlu0 %v1155, 104
    %v1306 = vpop.permute.xlu0 %1305
    %v1308 = vrot.slane %v1303, 4
    %v1309 = vsel %vm181, %v1308, %v1155
    %v1310 = vrot.slane %v1155, 4
    %v1311 = vsel %vm181, %v1303, %v1310
    %v1313 = vunpack.c.l.s4 1983009808
    %v1314 = vunpack.c.0.s8 %v1313
    %v1315 = vperm.slane %v1309, %v1314
    %v1317 = vunpack.c.l.s4 1983009808
    %v1318 = vunpack.c.0.s8 %v1317
    %v1319 = vperm.slane %v1311, %v1318
    %v1320 = vrot.slane %v1306, 4
    %v1321 = vsel %vm181, %v1320, %v1300
    %v1322 = vrot.slane %v1300, 4
    %v1323 = vsel %vm181, %v1306, %v1322
    %v1325 = vunpack.c.l.s4 1983009808
    %v1326 = vunpack.c.0.s8 %v1325
    %v1327 = vperm.slane %v1321, %v1326
    %v1329 = vunpack.c.l.s4 1983009808
    %v1330 = vunpack.c.0.s8 %v1329
    %v1331 = vperm.slane %v1323, %v1330
    %v1332 = vrot.slane %v1327, 4
    %v1333 = vsel %vm181, %v1332, %v1315
    %v1334 = vrot.slane %v1315, 4
    %v1335 = vsel %vm181, %v1327, %v1334
    %v1337 = vunpack.c.l.s4 1934713408
    %v1338 = vunpack.c.0.s8 %v1337
    %v1339 = vperm.slane %v1333, %v1338
    %v1341 = vunpack.c.l.s4 1934713408
    %v1342 = vunpack.c.0.s8 %v1341
    %v1343 = vperm.slane %v1335, %v1342
    %v1344 = vrot.slane %v1331, 4
    %v1345 = vsel %vm181, %v1344, %v1319
    %v1346 = vrot.slane %v1319, 4
    %v1347 = vsel %vm181, %v1331, %v1346
    %v1349 = vunpack.c.l.s4 1934713408
    %v1350 = vunpack.c.0.s8 %v1349
    %v1351 = vperm.slane %v1345, %v1350
    %v1353 = vunpack.c.l.s4 1934713408
    %v1354 = vunpack.c.0.s8 %v1353
    %v1355 = vperm.slane %v1347, %v1354
    %v1356 = vrot.slane %v1339, 4
    %v1357 = vsel %vm181, 0.0, %v1356
    %v1358 = vrot.slane %v1343, 4
    %v1359 = vsel %vm181, 0.0, %v1358
    %v1360 = vrot.slane %v1351, 4
    %v1361 = vsel %vm181, 0.0, %v1360
    %v1362 = vrot.slane %v1355, 4
    %v1363 = vsel %vm181, 0.0, %v1362
    %v1364 = vsel %vm181, %v1358, %v1339
    %v1366 = vunpack.c.l.s4 1983009808
    %v1367 = vunpack.c.0.s8 %v1366
    %v1368 = vperm.slane %v1364, %v1367
    %v1369 = vrot.slane %v1359, 4
    %v1370 = vsel %vm181, %v1369, %v1357
    %v1372 = vunpack.c.l.s4 1983009808
    %v1373 = vunpack.c.0.s8 %v1372
    %v1374 = vperm.slane %v1370, %v1373
    %v1375 = vsel %vm181, %v1362, %v1351
    %v1377 = vunpack.c.l.s4 1983009808
    %v1378 = vunpack.c.0.s8 %v1377
    %v1379 = vperm.slane %v1375, %v1378
    %v1380 = vrot.slane %v1363, 4
    %v1381 = vsel %vm181, %v1380, %v1361
    %v1383 = vunpack.c.l.s4 1983009808
    %v1384 = vunpack.c.0.s8 %v1383
    %v1385 = vperm.slane %v1381, %v1384
    %v1386 = vrot.slane %v1374, 4
    %v1387 = vsel %vm181, %v1386, %v1368
    %v1388 = vrot.slane %v1368, 4
    %v1389 = vsel %vm181, %v1374, %v1388
    %v1391 = vunpack.c.l.s4 1934713408
    %v1392 = vunpack.c.0.s8 %v1391
    %v1393 = vperm.slane %v1387, %v1392
    %v1395 = vunpack.c.l.s4 1934713408
    %v1396 = vunpack.c.0.s8 %v1395
    %v1397 = vperm.slane %v1389, %v1396
    %v1398 = vrot.slane %v1385, 4
    %v1399 = vsel %vm181, %v1398, %v1379
    %v1400 = vrot.slane %v1379, 4
    %v1401 = vsel %vm181, %v1385, %v1400
    %v1403 = vunpack.c.l.s4 1934713408
    %v1404 = vunpack.c.0.s8 %v1403
    %v1405 = vperm.slane %v1399, %v1404
    %v1407 = vunpack.c.l.s4 1934713408
    %v1408 = vunpack.c.0.s8 %v1407
    %v1409 = vperm.slane %v1401, %v1408
    %v1410 = vrot.slane %v1405, 4
    %v1411 = vsel %vm181, %v1410, %v1393
    %v1412 = vrot.slane %v1393, 4
    %v1413 = vsel %vm181, %v1405, %v1412
    %v1414 = vrot.slane %v1409, 4
    %v1415 = vsel %vm181, %v1414, %v1397
    %v1416 = vrot.slane %v1397, 4
    %v1417 = vsel %vm181, %v1409, %v1416
    %1419 = vrot.lane.b32.xlu0 %v1176, 120
    %v1420 = vpop.permute.xlu0 %1419
    %1422 = vrot.lane.b32.xlu0 %v1176, 112
    %v1423 = vpop.permute.xlu0 %1422
    %1425 = vrot.lane.b32.xlu0 %v1176, 104
    %v1426 = vpop.permute.xlu0 %1425
    %v1428 = vrot.slane %v1423, 4
    %v1429 = vsel %vm181, %v1428, %v1176
    %v1430 = vrot.slane %v1176, 4
    %v1431 = vsel %vm181, %v1423, %v1430
    %v1433 = vunpack.c.l.s4 1983009808
    %v1434 = vunpack.c.0.s8 %v1433
    %v1435 = vperm.slane %v1429, %v1434
    %v1437 = vunpack.c.l.s4 1983009808
    %v1438 = vunpack.c.0.s8 %v1437
    %v1439 = vperm.slane %v1431, %v1438
    %v1440 = vrot.slane %v1426, 4
    %v1441 = vsel %vm181, %v1440, %v1420
    %v1442 = vrot.slane %v1420, 4
    %v1443 = vsel %vm181, %v1426, %v1442
    %v1445 = vunpack.c.l.s4 1983009808
    %v1446 = vunpack.c.0.s8 %v1445
    %v1447 = vperm.slane %v1441, %v1446
    %v1449 = vunpack.c.l.s4 1983009808
    %v1450 = vunpack.c.0.s8 %v1449
    %v1451 = vperm.slane %v1443, %v1450
    %v1452 = vrot.slane %v1447, 4
    %v1453 = vsel %vm181, %v1452, %v1435
    %v1454 = vrot.slane %v1435, 4
    %v1455 = vsel %vm181, %v1447, %v1454
    %v1457 = vunpack.c.l.s4 1934713408
    %v1458 = vunpack.c.0.s8 %v1457
    %v1459 = vperm.slane %v1453, %v1458
    %v1461 = vunpack.c.l.s4 1934713408
    %v1462 = vunpack.c.0.s8 %v1461
    %v1463 = vperm.slane %v1455, %v1462
    %v1464 = vrot.slane %v1451, 4
    %v1465 = vsel %vm181, %v1464, %v1439
    %v1466 = vrot.slane %v1439, 4
    %v1467 = vsel %vm181, %v1451, %v1466
    %v1469 = vunpack.c.l.s4 1934713408
    %v1470 = vunpack.c.0.s8 %v1469
    %v1471 = vperm.slane %v1465, %v1470
    %v1473 = vunpack.c.l.s4 1934713408
    %v1474 = vunpack.c.0.s8 %v1473
    %v1475 = vperm.slane %v1467, %v1474
    %v1476 = vrot.slane %v1459, 4
    %v1477 = vsel %vm181, 0.0, %v1476
    %v1478 = vrot.slane %v1463, 4
    %v1479 = vsel %vm181, 0.0, %v1478
    %v1480 = vrot.slane %v1471, 4
    %v1481 = vsel %vm181, 0.0, %v1480
    %v1482 = vrot.slane %v1475, 4
    %v1483 = vsel %vm181, 0.0, %v1482
    %v1484 = vsel %vm181, %v1478, %v1459
    %v1486 = vunpack.c.l.s4 1983009808
    %v1487 = vunpack.c.0.s8 %v1486
    %v1488 = vperm.slane %v1484, %v1487
    %v1489 = vrot.slane %v1479, 4
    %v1490 = vsel %vm181, %v1489, %v1477
    %v1492 = vunpack.c.l.s4 1983009808
    %v1493 = vunpack.c.0.s8 %v1492
    %v1494 = vperm.slane %v1490, %v1493
    %v1495 = vsel %vm181, %v1482, %v1471
    %v1497 = vunpack.c.l.s4 1983009808
    %v1498 = vunpack.c.0.s8 %v1497
    %v1499 = vperm.slane %v1495, %v1498
    %v1500 = vrot.slane %v1483, 4
    %v1501 = vsel %vm181, %v1500, %v1481
    %v1503 = vunpack.c.l.s4 1983009808
    %v1504 = vunpack.c.0.s8 %v1503
    %v1505 = vperm.slane %v1501, %v1504
    %v1506 = vrot.slane %v1494, 4
    %v1507 = vsel %vm181, %v1506, %v1488
    %v1508 = vrot.slane %v1488, 4
    %v1509 = vsel %vm181, %v1494, %v1508
    %v1511 = vunpack.c.l.s4 1934713408
    %v1512 = vunpack.c.0.s8 %v1511
    %v1513 = vperm.slane %v1507, %v1512
    %v1515 = vunpack.c.l.s4 1934713408
    %v1516 = vunpack.c.0.s8 %v1515
    %v1517 = vperm.slane %v1509, %v1516
    %v1518 = vrot.slane %v1505, 4
    %v1519 = vsel %vm181, %v1518, %v1499
    %v1520 = vrot.slane %v1499, 4
    %v1521 = vsel %vm181, %v1505, %v1520
    %v1523 = vunpack.c.l.s4 1934713408
    %v1524 = vunpack.c.0.s8 %v1523
    %v1525 = vperm.slane %v1519, %v1524
    %v1527 = vunpack.c.l.s4 1934713408
    %v1528 = vunpack.c.0.s8 %v1527
    %v1529 = vperm.slane %v1521, %v1528
    %v1530 = vrot.slane %v1525, 4
    %v1531 = vsel %vm181, %v1530, %v1513
    %v1532 = vrot.slane %v1513, 4
    %v1533 = vsel %vm181, %v1525, %v1532
    %v1534 = vrot.slane %v1529, 4
    %v1535 = vsel %vm181, %v1534, %v1517
    %v1536 = vrot.slane %v1517, 4
    %v1537 = vsel %vm181, %v1529, %v1536
    %v1539 = vsel %vm531, %v1291, 0
    %v1542 = vsel %vm531, %v1411, 0
    %1544 = vmatpush.xpose.msra.mxu0 0.0
    %1545 = vmatpush.xpose.msra.mxu0 0.0
    %1546 = vmatpush.xpose.msra.mxu0 0.0
    %1547 = vmatpush.xpose.msra.mxu0 0.0
    %1548 = vmatpush.xpose.msra.mxu0 0.0
    %1549 = vmatpush.xpose.msra.mxu0 0.0
    %1550 = vmatpush.xpose.msra.mxu0 0.0
    %1551 = vmatpush.xpose.msra.mxu0 0.0
    %1552 = vmatpush.xpose.msra.mxu0 0.0
    %1553 = vmatpush.xpose.msra.mxu0 0.0
    %1554 = vmatpush.xpose.msra.mxu0 0.0
    %1555 = vmatpush.xpose.msra.mxu0 0.0
    %1556 = vmatpush.xpose.msra.mxu0 0.0
    %1557 = vmatpush.xpose.msra.mxu0 0.0
    %1558 = vmatpush.xpose.msra.mxu0 0.0
    %1559 = vmatpush.xpose.msra.mxu0 %v1542
    %1560 = vmatmul.f32.gmra.mxu0 %v1539
    %v1561 = vpop.f32.mrf.mxu0
    %v1562 = vadd.f32 %v46, %v1561
    %1563 = vdwg.mxu0
    %v1565 = vsel %vm531, %v1293, 0
    %v1568 = vsel %vm531, %v1413, 0
    %1570 = vmatpush.xpose.msra.mxu0 0.0
    %1571 = vmatpush.xpose.msra.mxu0 0.0
    %1572 = vmatpush.xpose.msra.mxu0 0.0
    %1573 = vmatpush.xpose.msra.mxu0 0.0
    %1574 = vmatpush.xpose.msra.mxu0 0.0
    %1575 = vmatpush.xpose.msra.mxu0 0.0
    %1576 = vmatpush.xpose.msra.mxu0 0.0
    %1577 = vmatpush.xpose.msra.mxu0 0.0
    %1578 = vmatpush.xpose.msra.mxu0 0.0
    %1579 = vmatpush.xpose.msra.mxu0 0.0
    %1580 = vmatpush.xpose.msra.mxu0 0.0
    %1581 = vmatpush.xpose.msra.mxu0 0.0
    %1582 = vmatpush.xpose.msra.mxu0 0.0
    %1583 = vmatpush.xpose.msra.mxu0 0.0
    %1584 = vmatpush.xpose.msra.mxu0 0.0
    %1585 = vmatpush.xpose.msra.mxu0 %v1568
    %1586 = vmatmul.f32.gmra.mxu0 %v1565
    %v1587 = vpop.f32.mrf.mxu0
    %v1588 = vadd.f32 %v47, %v1587
    %1589 = vdwg.mxu0
    %v1591 = vsel %vm531, %v1295, 0
    %v1594 = vsel %vm531, %v1415, 0
    %1596 = vmatpush.xpose.msra.mxu0 0.0
    %1597 = vmatpush.xpose.msra.mxu0 0.0
    %1598 = vmatpush.xpose.msra.mxu0 0.0
    %1599 = vmatpush.xpose.msra.mxu0 0.0
    %1600 = vmatpush.xpose.msra.mxu0 0.0
    %1601 = vmatpush.xpose.msra.mxu0 0.0
    %1602 = vmatpush.xpose.msra.mxu0 0.0
    %1603 = vmatpush.xpose.msra.mxu0 0.0
    %1604 = vmatpush.xpose.msra.mxu0 0.0
    %1605 = vmatpush.xpose.msra.mxu0 0.0
    %1606 = vmatpush.xpose.msra.mxu0 0.0
    %1607 = vmatpush.xpose.msra.mxu0 0.0
    %1608 = vmatpush.xpose.msra.mxu0 0.0
    %1609 = vmatpush.xpose.msra.mxu0 0.0
    %1610 = vmatpush.xpose.msra.mxu0 0.0
    %1611 = vmatpush.xpose.msra.mxu0 %v1594
    %1612 = vmatmul.f32.gmra.mxu0 %v1591
    %v1613 = vpop.f32.mrf.mxu0
    %v1614 = vadd.f32 %v48, %v1613
    %1615 = vdwg.mxu0
    %v1617 = vsel %vm531, %v1297, 0
    %v1620 = vsel %vm531, %v1417, 0
    %1622 = vmatpush.xpose.msra.mxu0 0.0
    %1623 = vmatpush.xpose.msra.mxu0 0.0
    %1624 = vmatpush.xpose.msra.mxu0 0.0
    %1625 = vmatpush.xpose.msra.mxu0 0.0
    %1626 = vmatpush.xpose.msra.mxu0 0.0
    %1627 = vmatpush.xpose.msra.mxu0 0.0
    %1628 = vmatpush.xpose.msra.mxu0 0.0
    %1629 = vmatpush.xpose.msra.mxu0 0.0
    %1630 = vmatpush.xpose.msra.mxu0 0.0
    %1631 = vmatpush.xpose.msra.mxu0 0.0
    %1632 = vmatpush.xpose.msra.mxu0 0.0
    %1633 = vmatpush.xpose.msra.mxu0 0.0
    %1634 = vmatpush.xpose.msra.mxu0 0.0
    %1635 = vmatpush.xpose.msra.mxu0 0.0
    %1636 = vmatpush.xpose.msra.mxu0 0.0
    %1637 = vmatpush.xpose.msra.mxu0 %v1620
    %1638 = vmatmul.f32.gmra.mxu0 %v1617
    %v1639 = vpop.f32.mrf.mxu0
    %v1640 = vadd.f32 %v49, %v1639
    %1641 = vdwg.mxu0
    %v1642 = vsel %vm531, %v1562, -inf
    %1643 = vmax.xlane.f32.xlu0 %v1642
    %v1644 = vpop.xlane.xlu0 %1643
    %v1645 = vsel %vm531, %v1588, -inf
    %1646 = vmax.xlane.f32.xlu0 %v1645
    %v1647 = vpop.xlane.xlu0 %1646
    %v1648 = vsel %vm531, %v1614, -inf
    %1649 = vmax.xlane.f32.xlu0 %v1648
    %v1650 = vpop.xlane.xlu0 %1649
    %v1651 = vsel %vm531, %v1640, -inf
    %1652 = vmax.xlane.f32.xlu0 %v1651
    %v1653 = vpop.xlane.xlu0 %1652
    %v1654 = vsub.f32 %v1562, %v1644
    %v1655 = vsub.f32 %v1588, %v1647
    %v1656 = vsub.f32 %v1614, %v1650
    %v1657 = vsub.f32 %v1640, %v1653
    %v1658 = vmul.f32 %v1654, 1.442695
    %v1659 = vpow.pop %v1658
    %v1660 = vmul.f32 %v1655, 1.442695
    %v1661 = vpow.pop %v1660
    %v1662 = vmul.f32 %v1656, 1.442695
    %v1663 = vpow.pop %v1662
    %v1664 = vmul.f32 %v1657, 1.442695
    %v1665 = vpow.pop %v1664
    %v1666 = vsel %vm531, %v1659, 0.0
    %1667 = vadd.xlane.f32.xlu0 %v1666
    %v1668 = vpop.xlane.xlu0 %1667
    %v1669 = vsel %vm531, %v1661, 0.0
    %1670 = vadd.xlane.f32.xlu0 %v1669
    %v1671 = vpop.xlane.xlu0 %1670
    %v1672 = vsel %vm531, %v1663, 0.0
    %1673 = vadd.xlane.f32.xlu0 %v1672
    %v1674 = vpop.xlane.xlu0 %1673
    %v1675 = vsel %vm531, %v1665, 0.0
    %1676 = vadd.xlane.f32.xlu0 %v1675
    %v1677 = vpop.xlane.xlu0 %1676
    %v1678 = vrcp.pop %v1668
    %v1679 = vrcp.pop %v1671
    %v1680 = vrcp.pop %v1674
    %v1681 = vrcp.pop %v1677
    %v1682 = vmul.f32 %v1659, %v1678
    %v1683 = vmul.f32 %v1661, %v1679
    %v1684 = vmul.f32 %v1663, %v1680
    %v1685 = vmul.f32 %v1665, %v1681
    %v1687 = vsel %vm531, %v1682, 0
    %1689 = vmatpush.msra.mxu0 0.0
    %1690 = vmatpush.msra.mxu0 0.0
    %1691 = vmatpush.msra.mxu0 0.0
    %1692 = vmatpush.msra.mxu0 0.0
    %1693 = vmatpush.msra.mxu0 0.0
    %1694 = vmatpush.msra.mxu0 0.0
    %1695 = vmatpush.msra.mxu0 0.0
    %1696 = vmatpush.msra.mxu0 0.0
    %1697 = vmatpush.msra.mxu0 0.0
    %1698 = vmatpush.msra.mxu0 0.0
    %1699 = vmatpush.msra.mxu0 0.0
    %1700 = vmatpush.msra.mxu0 0.0
    %1701 = vmatpush.msra.mxu0 0.0
    %1702 = vmatpush.msra.mxu0 0.0
    %1703 = vmatpush.msra.mxu0 0.0
    %1704 = vmatpush.msra.mxu0 %v1531
    %1705 = vmatmul.f32.gmra.mxu0 %v1687
    %v1706 = vpop.f32.mrf.mxu0
    %v1707 = vadd.f32 0.0, %v1706
    %1708 = vdwg.mxu0
    %v1710 = vsel %vm531, %v1683, 0
    %1712 = vmatpush.msra.mxu0 0.0
    %1713 = vmatpush.msra.mxu0 0.0
    %1714 = vmatpush.msra.mxu0 0.0
    %1715 = vmatpush.msra.mxu0 0.0
    %1716 = vmatpush.msra.mxu0 0.0
    %1717 = vmatpush.msra.mxu0 0.0
    %1718 = vmatpush.msra.mxu0 0.0
    %1719 = vmatpush.msra.mxu0 0.0
    %1720 = vmatpush.msra.mxu0 0.0
    %1721 = vmatpush.msra.mxu0 0.0
    %1722 = vmatpush.msra.mxu0 0.0
    %1723 = vmatpush.msra.mxu0 0.0
    %1724 = vmatpush.msra.mxu0 0.0
    %1725 = vmatpush.msra.mxu0 0.0
    %1726 = vmatpush.msra.mxu0 0.0
    %1727 = vmatpush.msra.mxu0 %v1533
    %1728 = vmatmul.f32.gmra.mxu0 %v1710
    %v1729 = vpop.f32.mrf.mxu0
    %v1730 = vadd.f32 0.0, %v1729
    %1731 = vdwg.mxu0
    %v1733 = vsel %vm531, %v1684, 0
    %1735 = vmatpush.msra.mxu0 0.0
    %1736 = vmatpush.msra.mxu0 0.0
    %1737 = vmatpush.msra.mxu0 0.0
    %1738 = vmatpush.msra.mxu0 0.0
    %1739 = vmatpush.msra.mxu0 0.0
    %1740 = vmatpush.msra.mxu0 0.0
    %1741 = vmatpush.msra.mxu0 0.0
    %1742 = vmatpush.msra.mxu0 0.0
    %1743 = vmatpush.msra.mxu0 0.0
    %1744 = vmatpush.msra.mxu0 0.0
    %1745 = vmatpush.msra.mxu0 0.0
    %1746 = vmatpush.msra.mxu0 0.0
    %1747 = vmatpush.msra.mxu0 0.0
    %1748 = vmatpush.msra.mxu0 0.0
    %1749 = vmatpush.msra.mxu0 0.0
    %1750 = vmatpush.msra.mxu0 %v1535
    %1751 = vmatmul.f32.gmra.mxu0 %v1733
    %v1752 = vpop.f32.mrf.mxu0
    %v1753 = vadd.f32 0.0, %v1752
    %1754 = vdwg.mxu0
    %v1756 = vsel %vm531, %v1685, 0
    %1758 = vmatpush.msra.mxu0 0.0
    %1759 = vmatpush.msra.mxu0 0.0
    %1760 = vmatpush.msra.mxu0 0.0
    %1761 = vmatpush.msra.mxu0 0.0
    %1762 = vmatpush.msra.mxu0 0.0
    %1763 = vmatpush.msra.mxu0 0.0
    %1764 = vmatpush.msra.mxu0 0.0
    %1765 = vmatpush.msra.mxu0 0.0
    %1766 = vmatpush.msra.mxu0 0.0
    %1767 = vmatpush.msra.mxu0 0.0
    %1768 = vmatpush.msra.mxu0 0.0
    %1769 = vmatpush.msra.mxu0 0.0
    %1770 = vmatpush.msra.mxu0 0.0
    %1771 = vmatpush.msra.mxu0 0.0
    %1772 = vmatpush.msra.mxu0 0.0
    %1773 = vmatpush.msra.mxu0 %v1537
    %1774 = vmatmul.f32.gmra.mxu0 %v1756
    %v1775 = vpop.f32.mrf.mxu0
    %v1776 = vadd.f32 0.0, %v1775
    %1777 = vdwg.mxu0
    %v1778 = vrot.slane %v1753, 4
    %v1779 = vsel %vm181, %v1778, %v1707
    %v1780 = vrot.slane %v1707, 4
    %v1781 = vsel %vm181, %v1753, %v1780
    %v1783 = vunpack.c.l.s4 1983009808
    %v1784 = vunpack.c.0.s8 %v1783
    %v1785 = vperm.slane %v1779, %v1784
    %v1787 = vunpack.c.l.s4 1983009808
    %v1788 = vunpack.c.0.s8 %v1787
    %v1789 = vperm.slane %v1781, %v1788
    %v1790 = vrot.slane %v1776, 4
    %v1791 = vsel %vm181, %v1790, %v1730
    %v1792 = vrot.slane %v1730, 4
    %v1793 = vsel %vm181, %v1776, %v1792
    %v1795 = vunpack.c.l.s4 1983009808
    %v1796 = vunpack.c.0.s8 %v1795
    %v1797 = vperm.slane %v1791, %v1796
    %v1799 = vunpack.c.l.s4 1983009808
    %v1800 = vunpack.c.0.s8 %v1799
    %v1801 = vperm.slane %v1793, %v1800
    %v1802 = vrot.slane %v1797, 4
    %v1803 = vsel %vm181, %v1802, %v1785
    %v1804 = vrot.slane %v1785, 4
    %v1805 = vsel %vm181, %v1797, %v1804
    %v1807 = vunpack.c.l.s4 1934713408
    %v1808 = vunpack.c.0.s8 %v1807
    %v1809 = vperm.slane %v1803, %v1808
    %v1811 = vunpack.c.l.s4 1934713408
    %v1812 = vunpack.c.0.s8 %v1811
    %v1813 = vperm.slane %v1805, %v1812
    %v1814 = vrot.slane %v1801, 4
    %v1815 = vsel %vm181, %v1814, %v1789
    %v1816 = vrot.slane %v1789, 4
    %v1817 = vsel %vm181, %v1801, %v1816
    %v1819 = vunpack.c.l.s4 1934713408
    %v1820 = vunpack.c.0.s8 %v1819
    %v1821 = vperm.slane %v1815, %v1820
    %v1823 = vunpack.c.l.s4 1934713408
    %v1824 = vunpack.c.0.s8 %v1823
    %v1825 = vperm.slane %v1817, %v1824
    %v1826 = vrot.slane %v1809, 4
    %v1827 = vsel %vm181, 0.0, %v1826
    %v1828 = vrot.slane %v1813, 4
    %v1829 = vsel %vm181, 0.0, %v1828
    %v1830 = vrot.slane %v1821, 4
    %v1831 = vsel %vm181, 0.0, %v1830
    %v1832 = vrot.slane %v1825, 4
    %v1833 = vsel %vm181, 0.0, %v1832
    %v1834 = vsel %vm181, %v1828, %v1809
    %v1836 = vunpack.c.l.s4 1983009808
    %v1837 = vunpack.c.0.s8 %v1836
    %v1838 = vperm.slane %v1834, %v1837
    %v1839 = vrot.slane %v1829, 4
    %v1840 = vsel %vm181, %v1839, %v1827
    %v1842 = vunpack.c.l.s4 1983009808
    %v1843 = vunpack.c.0.s8 %v1842
    %v1844 = vperm.slane %v1840, %v1843
    %v1845 = vsel %vm181, %v1832, %v1821
    %v1847 = vunpack.c.l.s4 1983009808
    %v1848 = vunpack.c.0.s8 %v1847
    %v1849 = vperm.slane %v1845, %v1848
    %v1850 = vrot.slane %v1833, 4
    %v1851 = vsel %vm181, %v1850, %v1831
    %v1853 = vunpack.c.l.s4 1983009808
    %v1854 = vunpack.c.0.s8 %v1853
    %v1855 = vperm.slane %v1851, %v1854
    %v1856 = vrot.slane %v1844, 4
    %v1857 = vsel %vm181, %v1856, %v1838
    %v1858 = vrot.slane %v1838, 4
    %v1859 = vsel %vm181, %v1844, %v1858
    %v1861 = vunpack.c.l.s4 1934713408
    %v1862 = vunpack.c.0.s8 %v1861
    %v1863 = vperm.slane %v1857, %v1862
    %v1865 = vunpack.c.l.s4 1934713408
    %v1866 = vunpack.c.0.s8 %v1865
    %v1867 = vperm.slane %v1859, %v1866
    %v1868 = vrot.slane %v1855, 4
    %v1869 = vsel %vm181, %v1868, %v1849
    %v1870 = vrot.slane %v1849, 4
    %v1871 = vsel %vm181, %v1855, %v1870
    %v1873 = vunpack.c.l.s4 1934713408
    %v1874 = vunpack.c.0.s8 %v1873
    %v1875 = vperm.slane %v1869, %v1874
    %v1877 = vunpack.c.l.s4 1934713408
    %v1878 = vunpack.c.0.s8 %v1877
    %v1879 = vperm.slane %v1871, %v1878
    %v1880 = vrot.slane %v1875, 4
    %v1881 = vsel %vm181, %v1880, %v1863
    %v1882 = vrot.slane %v1863, 4
    %v1883 = vsel %vm181, %v1875, %v1882
    %v1884 = vrot.slane %v1879, 4
    %v1885 = vsel %vm181, %v1884, %v1867
    %v1886 = vrot.slane %v1867, 4
    %v1887 = vsel %vm181, %v1879, %v1886
    %1889 = vrot.lane.b32.xlu0 %v1883, 8
    %v1890 = vpop.permute.xlu0 %1889
    %1893 = vrot.lane.b32.xlu0 %v1885, 16
    %v1894 = vpop.permute.xlu0 %1893
    %1897 = vrot.lane.b32.xlu0 %v1887, 24
    %v1898 = vpop.permute.xlu0 %1897
    %v1900 = vsel %vm531, %v1881, %v1890
    %v1901 = vsel %vm895, %v1900, %v1894
    %v1902 = vsel %vm897, %v1901, %v1898
    %v1903 = vperm.slane %v1080, 3
    %v1905 = vsel %vm69, %v1902, 0
    %1907 = vmatpush.msra.mxu0 0.0
    %1908 = vmatpush.msra.mxu0 0.0
    %1909 = vmatpush.msra.mxu0 0.0
    %1910 = vmatpush.msra.mxu0 0.0
    %1911 = vmatpush.msra.mxu0 0.0
    %1912 = vmatpush.msra.mxu0 0.0
    %1913 = vmatpush.msra.mxu0 0.0
    %1914 = vmatpush.msra.mxu0 0.0
    %1915 = vmatpush.msra.mxu0 0.0
    %1916 = vmatpush.msra.mxu0 0.0
    %1917 = vmatpush.msra.mxu0 0.0
    %1918 = vmatpush.msra.mxu0 0.0
    %1919 = vmatpush.msra.mxu0 %v1078
    %1920 = vmatpush.msra.mxu0 %v1077
    %1921 = vmatpush.msra.mxu0 %v1076
    %1922 = vmatpush.msra.mxu0 %v1075
    %1923 = vmatmul.f32.gmra.mxu0 %v1905
    %v1924 = vpop.f32.mrf.mxu0
    %v1925 = vadd.f32 %v1903, %v1924
    %1926 = vdwg.mxu0
    %v1927 = vadd.f32 %v1061, %v1925
    %v1928 = vsel %vm69, %v1927, 0.0
    %1929 = vadd.xlane.f32.xlu0 %v1928
    %v1930 = vpop.xlane.xlu0 %1929
    %v1931 = vmul.f32 %v1930, %v79
    %v1932 = vsub.f32 %v1927, %v1931
    %v1933 = vmul.f32 %v1932, %v1932
    %v1934 = vsel %vm69, %v1933, 0.0
    %1935 = vadd.xlane.f32.xlu0 %v1934
    %v1936 = vpop.xlane.xlu0 %1935
    %v1937 = vmul.f32 %v1936, %v79
    %v1938 = vadd.f32 %v1937, 1e-05
    %v1939 = vrsqrt.pop %v1938
    %v1940 = vmul.f32 %v1939, %v1938
    %v1941 = vmul.f32 %v1940, %v1939
    %v1942 = vmul.f32 0.5, %v1941
    %v1943 = vsub.f32 1.5, %v1942
    %v1944 = vmul.f32 %v1939, %v1943
    %vm1945 = vweird.f32 %v1938
    %vm1946 = vweird.f32 %v1939
    %vm1947 = vmor %vm1945, %vm1946
    %v1948 = vsel %vm1947, %v1939, %v1944
    %v1949 = vmul.f32 %v1932, %v1948
    %v1950 = vperm.slane %v1082, 1
    %v1951 = vmul.f32 %v1949, %v1950
    %v1952 = vperm.slane %v1084, 1
    %v1953 = vadd.f32 %v1951, %v1952
    %s1954 = scalar_lea.vmem %s6, 32
    %v1955 = vld [vmem:[%s1954] sm:$0xff]
    %v1956 = vld [vmem:[%s1954 + $0x8] sm:$0xff]
    %v1957 = vld [vmem:[%s1954 + $0x10] sm:$0xff]
    %v1958 = vld [vmem:[%s1954 + $0x18] sm:$0xff]
    %s1959 = scalar_lea.vmem %s7, 1
    %v1960 = vld [vmem:[%s1959] sm:$0x1]
    %v1962 = vperm.slane %v1960, 0
    %v1965 = vsel %vm69, %v1953, 0
    %1967 = vmatpush.msra.mxu0 0.0
    %1968 = vmatpush.msra.mxu0 0.0
    %1969 = vmatpush.msra.mxu0 0.0
    %1970 = vmatpush.msra.mxu0 0.0
    %1971 = vmatpush.msra.mxu0 0.0
    %1972 = vmatpush.msra.mxu0 0.0
    %1973 = vmatpush.msra.mxu0 0.0
    %1974 = vmatpush.msra.mxu0 0.0
    %1975 = vmatpush.msra.mxu0 0.0
    %1976 = vmatpush.msra.mxu0 0.0
    %1977 = vmatpush.msra.mxu0 0.0
    %1978 = vmatpush.msra.mxu0 0.0
    %1979 = vmatpush.msra.mxu0 %v1958
    %1980 = vmatpush.msra.mxu0 %v1957
    %1981 = vmatpush.msra.mxu0 %v1956
    %1982 = vmatpush.msra.mxu0 %v1955
    %1983 = vmatmul.f32.gmra.mxu0 %v1965
    %v1984 = vpop.f32.mrf.mxu0
    %v1985 = vadd.f32 %v1962, %v1984
    %1986 = vdwg.mxu0
    %v1987 = vmul.f32 %v1985, 0.5
    %v1988 = vmul.f32 %v1985, 0.70710677
    %v1989 = vmul.f32 %v1988, %v1988
    %v1990 = vmin.f32 16.0, %v1989
    %v1991 = vmul.f32 %v1990, 2.1237322e-06
    %v1992 = vadd.f32 %v1991, 0.00028619796
    %v1993 = vmul.f32 %v1990, %v1992
    %v1994 = vadd.f32 %v1993, 0.0036580483
    %v1995 = vmul.f32 %v1990, %v1994
    %v1996 = vadd.f32 %v1995, 0.05243302
    %v1997 = vmul.f32 %v1990, %v1996
    %v1998 = vadd.f32 %v1997, 0.18741608
    %v1999 = vmul.f32 %v1990, %v1998
    %v2000 = vadd.f32 %v1999, 1.1283791
    %v2001 = vmul.f32 %v1988, %v2000
    %v2002 = vmul.f32 %v1990, 3.8918573e-05
    %v2003 = vadd.f32 %v2002, 0.001143296
    %v2004 = vmul.f32 %v1990, %v2003
    %v2005 = vadd.f32 %v2004, 0.014752088
    %v2006 = vmul.f32 %v1990, %v2005
    %v2007 = vadd.f32 %v2006, 0.112945676
    %v2008 = vmul.f32 %v1990, %v2007
    %v2009 = vadd.f32 %v2008, 0.4994258
    %v2010 = vmul.f32 %v1990, %v2009
    %v2011 = vadd.f32 %v2010, 1.0
    %v2012 = vrcp.pop %v2011
    %v2013 = vmul.f32 %v2011, %v2012
    %v2014 = vsub.f32 1.0, %v2013
    %v2015 = vmul.f32 %v2012, %v2014
    %v2016 = vadd.f32 %v2012, %v2015
    %vm2017 = vweird.f32 %v2011
    %vm2018 = vweird.f32 %v2012
    %vm2019 = vmor %vm2017, %vm2018
    %v2020 = vsel %vm2019, %v2012, %v2016
    %v2021 = vand.u32 2147483647, %v2011
    %vm2022 = vcmp.eq.f32.partialorder %v2021, 8.507059e+37
    %v2023 = vand.u32 %v2011, 2147483648
    %v2024 = vor.u32 1.1754944e-38, %v2023
    %v2025 = vsel %vm2022, %v2024, %v2020
    %v2026 = vmul.f32 %v2001, %v2025
    %v2027 = vmin.f32 %v2026, 1.0
    %v2028 = vmax.f32 %v2027, -1.0
    %v2029 = vadd.f32 %v2028, 1.0
    %v2030 = vmul.f32 %v1987, %v2029
    %s2031 = scalar_lea.vmem %s8, 64
    %v2032 = vld [vmem:[%s2031] sm:$0xff]
    %v2033 = vld [vmem:[%s2031 + $0x8] sm:$0xff]
    %v2034 = vld [vmem:[%s2031 + $0x10] sm:$0xff]
    %v2035 = vld [vmem:[%s2031 + $0x18] sm:$0xff]
    %v2036 = vld [vmem:[%s2031 + $0x20] sm:$0xff]
    %v2037 = vld [vmem:[%s2031 + $0x28] sm:$0xff]
    %v2038 = vld [vmem:[%s2031 + $0x30] sm:$0xff]
    %v2039 = vld [vmem:[%s2031 + $0x38] sm:$0xff]
    %s2040 = scalar_lea.vmem %s9, 1
    %v2041 = vld [vmem:[%s2040] sm:$0x1]
    %v2043 = vperm.slane %v2041, 0
    %v2046 = vsel %vm1037, %v2030, 0
    %2048 = vmatpush.msra.mxu0 0.0
    %2049 = vmatpush.msra.mxu0 0.0
    %2050 = vmatpush.msra.mxu0 0.0
    %2051 = vmatpush.msra.mxu0 0.0
    %2052 = vmatpush.msra.mxu0 0.0
    %2053 = vmatpush.msra.mxu0 0.0
    %2054 = vmatpush.msra.mxu0 0.0
    %2055 = vmatpush.msra.mxu0 0.0
    %2056 = vmatpush.msra.mxu0 %v2039
    %2057 = vmatpush.msra.mxu0 %v2038
    %2058 = vmatpush.msra.mxu0 %v2037
    %2059 = vmatpush.msra.mxu0 %v2036
    %2060 = vmatpush.msra.mxu0 %v2035
    %2061 = vmatpush.msra.mxu0 %v2034
    %2062 = vmatpush.msra.mxu0 %v2033
    %2063 = vmatpush.msra.mxu0 %v2032
    %2064 = vmatmul.f32.gmra.mxu0 %v2046
    %v2065 = vpop.f32.mrf.mxu0
    %v2066 = vadd.f32 %v2043, %v2065
    %2067 = vdwg.mxu0
    %v2068 = vadd.f32 %v1927, %v2066
    %v2069 = vld [vmem:[%s10] sm:$0x3]
    %v2070 = vsel %vm69, %v2068, 0.0
    %2071 = vadd.xlane.f32.xlu0 %v2070
    %v2072 = vpop.xlane.xlu0 %2071
    %v2073 = vmul.f32 %v2072, %v79
    %v2074 = vsub.f32 %v2068, %v2073
    %v2075 = vmul.f32 %v2074, %v2074
    %v2076 = vsel %vm69, %v2075, 0.0
    %2077 = vadd.xlane.f32.xlu0 %v2076
    %v2078 = vpop.xlane.xlu0 %2077
    %v2079 = vmul.f32 %v2078, %v79
    %v2080 = vadd.f32 %v2079, 1e-05
    %v2081 = vrsqrt.pop %v2080
    %v2082 = vmul.f32 %v2081, %v2080
    %v2083 = vmul.f32 %v2082, %v2081
    %v2084 = vmul.f32 0.5, %v2083
    %v2085 = vsub.f32 1.5, %v2084
    %v2086 = vmul.f32 %v2081, %v2085
    %vm2087 = vweird.f32 %v2080
    %vm2088 = vweird.f32 %v2081
    %vm2089 = vmor %vm2087, %vm2088
    %v2090 = vsel %vm2089, %v2081, %v2086
    %v2091 = vmul.f32 %v2074, %v2090
    %v2092 = vperm.slane %v2069, 0
    %v2093 = vmul.f32 %v2091, %v2092
    %v2094 = vperm.slane %v2069, 1
    %v2095 = vadd.f32 %v2093, %v2094
    %v2096 = vld [vmem:[%s11] sm:$0xff]
    %v2097 = vld [vmem:[%s11 + $0x8] sm:$0xff]
    %v2098 = vld [vmem:[%s11 + $0x10] sm:$0xff]
    %v2099 = vld [vmem:[%s11 + $0x18] sm:$0xff]
    %v2100 = vld [vmem:[%s12] sm:$0x1]
    %v2102 = vsel %vm69, %v2095, 0
    %2104 = vmatpush.msra.mxu0 0.0
    %2105 = vmatpush.msra.mxu0 0.0
    %2106 = vmatpush.msra.mxu0 0.0
    %2107 = vmatpush.msra.mxu0 0.0
    %2108 = vmatpush.msra.mxu0 0.0
    %2109 = vmatpush.msra.mxu0 0.0
    %2110 = vmatpush.msra.mxu0 0.0
    %2111 = vmatpush.msra.mxu0 0.0
    %2112 = vmatpush.msra.mxu0 0.0
    %2113 = vmatpush.msra.mxu0 0.0
    %2114 = vmatpush.msra.mxu0 0.0
    %2115 = vmatpush.msra.mxu0 0.0
    %2116 = vmatpush.msra.mxu0 %v2099
    %2117 = vmatpush.msra.mxu0 %v2098
    %2118 = vmatpush.msra.mxu0 %v2097
    %2119 = vmatpush.msra.mxu0 %v2096
    %2120 = vmatmul.f32.gmra.mxu0 %v2102
    %v2121 = vpop.f32.mrf.mxu0
    %v2122 = vadd.f32 %v2100, %v2121
    %2123 = vdwg.mxu0
    %vm2124 = vcmask 16384
    %2125 = vst.msk [vmem:[#allocation2] sm:$0x1] %vm2124, %v2122
    // Predicated region
    $region54: #{graphormer_forward.1} parent=1 // pred_check
      _
    $region55: #{graphormer_forward.1} parent=1 // pred_check_branch
      %2127 = sbr.rel (0) target = $region57
    $region56: #{graphormer_forward.1} parent=1 // pred_region
      %2129 = vsyncadd [#allocation3], 0
      %s2131 = sshll.u32 [#allocation2], 4
      %s2132 = int_to_ptr.vmem [resolvable:$true] %s2131
      %s2133 = sshll.u32 %s13, 4
      %s2134 = int_to_ptr.hbm [resolvable:$true] %s2133
      %2136 = dma.vmem_to_hbm [thread:$0]  %s2132, 16, %s2134, [#allocation3]
    $region57: #{graphormer_forward.1} parent=1 // pred_fallthru
      _
    // Predicated region
    $region58: #{graphormer_forward.1} parent=1 // pred_check
      _
    $region59: #{graphormer_forward.1} parent=1 // pred_check_branch
      %2138 = sbr.rel (0) target = $region61
    $region60: #{graphormer_forward.1} parent=1 // pred_region
      %2140 = dma.done [#allocation3], 16
    $region61: #{graphormer_forward.1} parent=1 // pred_fallthru
      _
    %2141 = vsyncpa [#allocation3], 1

</llo_original>
